<compile_context>
chip_gen: v7x
topology: tpu7x:2x2x1
jax: 0.10.0
libtpu: 0.0.40
codegen_flags: <defaults>
</compile_context>

<pallas_src>
import functools

import jax
import jax.numpy as jnp
from jax import lax
from jax.experimental import pallas as pl
from jax.experimental.pallas import tpu as pltpu


# ----------------------------- Pallas kernel --------------------------------

def _make_coordconv_kernel(B, H, W, Cout, KH, pad_h, with_r):
    """Builds the fused CoordConv kernel for static shape parameters."""
    ncc = 3 if with_r else 2          # number of appended coordinate channels
    N = W * Cout                      # Wo == W (same padding), lane-dense out
    f32 = jnp.float32

    def kernel(xf_ref, ax_ref, ac_ref, brow_ref, o_ref):
        # xf_ref  : (B, H, Cin0*W)   channel-major fused input rows
        # ax_ref  : (KH, Cin0*W, N)  banded weights, original channels
        # ac_ref  : (KH, ncc*W,  N)  banded weights, coordinate channels
        # brow_ref: (1, N)           bias tiled over Wo
        # o_ref   : (B, H, N)        lane-dense output rows (Ho, Wo*Cout)

        # ---- AddCoords, fused: coord rows (H, ncc*W), channel-major lanes ----
        li = lax.broadcasted_iota(jnp.int32, (H, ncc * W), 1)
        hi = lax.broadcasted_iota(jnp.int32, (H, ncc * W), 0).astype(f32)
        # Matches PyTorch AddCoords: xx varies along H, yy varies along W.
        # (H==1 or W==1 divides by zero, same as the reference module.)
        xx = 2.0 * hi / (H - 1) - 1.0
        yy = 2.0 * (li - W).astype(f32) / (W - 1) - 1.0
        cf = jnp.where(li < W, xx, yy)
        if with_r:
            yy_r = 2.0 * (li - 2 * W).astype(f32) / (W - 1) - 1.0
            rr = jnp.sqrt((xx - 0.5) ** 2 + (yy_r - 0.5) ** 2)
            cf = jnp.where(li < 2 * W, cf, rr)

        # ---- row-shift matrices: implement zero padding along H -------------
        # S_d[i, j] = 1 iff j == i + d ; (S_d @ F)[ho] = F[ho + d] (0 outside).
        row = lax.broadcasted_iota(jnp.int32, (H, H), 0)
        col = lax.broadcasted_iota(jnp.int32, (H, H), 1)
        shift_mat = {kh: (col - row == (kh - pad_h)).astype(f32)
                     for kh in range(KH) if kh != pad_h}

        def band_accum(F, a_ref, acc):
            # acc[ho] += sum_kh F[ho + kh - pad_h] @ a_ref[kh]
            for kh in range(KH):
                if kh == pad_h:
                    Fd = F
                else:
                    Fd = jnp.dot(shift_mat[kh], F,
                                 preferred_element_type=f32)
                acc = acc + jnp.dot(Fd, a_ref[kh],
                                    preferred_element_type=f32)
            return acc

        # Batch-invariant part: bias (accumulator init) + coord contribution.
        base = jnp.broadcast_to(brow_ref[...].astype(f32), (H, N))
        base = band_accum(cf, ac_ref, base)

        # Per-image part: KH matmuls with K = Cin0*W = 64 each.
        for b in range(B):                       # static loop, single grid step
            acc = band_accum(xf_ref[b].astype(f32), ax_ref, base)
            o_ref[b] = acc.astype(o_ref.dtype)   # one full lane-dense store

    return kernel


# ------------------------------ wrapper --------------------------------------

def _build_banded_weights(w_hwio, W, pad_w, cin0):
    """A[kh, ci*W + w, wo*Cout + co] = w_hwio[kh, w - wo + pad_w, ci, co]
    (zero where the kw index is outside [0, KW) -> zero padding along W).
    Returned split into (original-channel, coord-channel) banded matrices."""
    KH, KW, cin_aug, cout = w_hwio.shape
    wo_ = W  # same padding -> Wo == W
    w_idx = jnp.arange(W)[:, None]
    wo_idx = jnp.arange(wo_)[None, :]
    kw_rel = w_idx - wo_idx + pad_w                       # (W, Wo)
    valid = (kw_rel >= 0) & (kw_rel < KW)
    kw_cl = jnp.clip(kw_rel, 0, KW - 1)
    t = w_hwio[:, kw_cl, :, :]                            # (KH, W, Wo, Cin, Cout)
    t = t * valid[None, :, :, None, None].astype(w_hwio.dtype)
    t = jnp.transpose(t, (0, 3, 1, 2, 4))                 # (KH, Cin, W, Wo, Cout)
    a_full = t.reshape(KH, cin_aug * W, wo_ * cout)
    return a_full[:, :cin0 * W, :], a_full[:, cin0 * W:, :]


def coord_conv_forward(x_nchw, w_hwio, bias, padding=(1, 1), with_r=False):
    """CoordConv forward, NCHW in / NCHW out (matches the PyTorch module)."""
    B, cin0, H, W = x_nchw.shape
    KH, KW, cin_aug, cout = w_hwio.shape
    ncc = 3 if with_r else 2
    assert cin_aug == cin0 + ncc
    ph, pw = padding
    # stride-1 "same" conv only (kernel_size=3, padding=1 in this module)
    assert H + 2 * ph - KH + 1 == H and W + 2 * pw - KW + 1 == W
    N = W * cout

    # Channel-major fused rows: xf[b, h, ci*W + w] = x[b, ci, h, w]
    xf = jnp.transpose(x_nchw, (0, 2, 1, 3)).reshape(B, H, cin0 * W)
    a_x, a_c = _build_banded_weights(w_hwio, W, pw, cin0)
    bias_row = jnp.tile(bias, W).reshape(1, N)

    kernel = _make_coordconv_kernel(B, H, W, cout, KH, ph, with_r)
    out = pl.pallas_call(
        kernel,
        out_shape=jax.ShapeDtypeStruct((B, H, N), x_nchw.dtype),
        grid=(1,),   # whole batch in one step; add a parallel axis when scaling
        in_specs=[
            pl.BlockSpec((B, H, cin0 * W), lambda i: (0, 0, 0)),
            pl.BlockSpec((KH, cin0 * W, N), lambda i: (0, 0, 0)),
            pl.BlockSpec((KH, ncc * W, N), lambda i: (0, 0, 0)),
            pl.BlockSpec((1, N), lambda i: (0, 0)),
        ],
        out_specs=pl.BlockSpec((B, H, N), lambda i: (0, 0, 0)),
        compiler_params=pltpu.CompilerParams(
            dimension_semantics=("arbitrary",)),
    )(xf, a_x, a_c, bias_row)

    # (B, Ho, Wo*Cout) -> NCHW
    return jnp.transpose(out.reshape(B, H, W, cout), (0, 3, 1, 2))


# ------------------------------ reference ------------------------------------

def coord_conv_reference(x_nchw, w_hwio, bias, padding=(1, 1), with_r=False):
    B, _, H, W = x_nchw.shape
    x_nhwc = jnp.transpose(x_nchw, (0, 2, 3, 1))
    hh = jnp.arange(H, dtype=jnp.float32)[:, None]
    ww = jnp.arange(W, dtype=jnp.float32)[None, :]
    xx = jnp.broadcast_to(2.0 * hh / (H - 1) - 1.0, (H, W))
    yy = jnp.broadcast_to(2.0 * ww / (W - 1) - 1.0, (H, W))
    feats = [x_nhwc,
             jnp.broadcast_to(xx[None, :, :, None], (B, H, W, 1)),
             jnp.broadcast_to(yy[None, :, :, None], (B, H, W, 1))]
    if with_r:
        rr = jnp.sqrt((xx - 0.5) ** 2 + (yy - 0.5) ** 2)
        feats.append(jnp.broadcast_to(rr[None, :, :, None], (B, H, W, 1)))
    ret = jnp.concatenate([f.astype(x_nhwc.dtype) for f in feats], axis=-1)
    out = lax.conv_general_dilated(
        ret, w_hwio, window_strides=(1, 1),
        padding=((padding[0], padding[0]), (padding[1], padding[1])),
        dimension_numbers=("NHWC", "HWIO", "NHWC"),
        precision=lax.Precision.HIGHEST)
    return jnp.transpose(out + bias[None, None, None, :], (0, 3, 1, 2))


# -------------------------------- main ----------------------------------------

if __name__ == "__main__":
    # Module config: CoordConv(in_channels=4, out_channels=8,
    #                          kernel_size=3, padding=1), with_r=False
    B, Cin, H, W = 2, 4, 16, 16
    Cout, K, PAD = 8, 3, 1
    Cin_conv = Cin + 2  # AddCoords appends xx, yy channels

    key = jax.random.PRNGKey(0)
    kx, kw, kb = jax.random.split(key, 3)

    x = jax.random.normal(kx, (B, Cin, H, W), dtype=jnp.float32)

    # Deterministic Conv2d parameter init (kaiming-uniform-like bounds).
    fan_in = Cin_conv * K * K
    bound = 1.0 / jnp.sqrt(fan_in)
    w_hwio = jax.random.uniform(kw, (K, K, Cin_conv, Cout),
                                minval=-bound, maxval=bound,
                                dtype=jnp.float32)
    bias = jax.random.uniform(kb, (Cout,), minval=-bound, maxval=bound,
                              dtype=jnp.float32)

    fwd = jax.jit(functools.partial(coord_conv_forward, padding=(PAD, PAD)))
    out = jax.block_until_ready(fwd(x, w_hwio, bias))

    ref = jax.block_until_ready(
        coord_conv_reference(x, w_hwio, bias, padding=(PAD, PAD)))

    assert out.shape == (B, Cout, H, W), out.shape
    err = float(jnp.max(jnp.abs(out - ref)))
    assert err < 5e-4, f"max abs err {err}"

    print("KERNEL_OK")
</pallas_src>

<mosaic_0001>
module attributes {stable_mosaic.version = 11 : i64} {
  func.func @kernel(%arg0: i32, %arg1: memref<2x16x64xf32, #tpu.memory_space<vmem>>, %arg2: memref<3x64x128xf32, #tpu.memory_space<vmem>>, %arg3: memref<3x32x128xf32, #tpu.memory_space<vmem>>, %arg4: memref<1x128xf32, #tpu.memory_space<vmem>>, %arg5: memref<2x16x128xf32, #tpu.memory_space<vmem>>) attributes {dimension_semantics = [#tpu.dimension_semantics<arbitrary>], iteration_bounds = array<i64: 1>, scalar_prefetch = 0 : i64, scratch_operands = 0 : i64, tpu.core_type = #tpu.core_type<tc>, window_params = [{pipeline_mode = #tpu.pipeline_mode<synchronous>, transform_indices = @transform_0, window_bounds = array<i64: 2, 16, 64>}, {pipeline_mode = #tpu.pipeline_mode<synchronous>, transform_indices = @transform_1, window_bounds = array<i64: 3, 64, 128>}, {pipeline_mode = #tpu.pipeline_mode<synchronous>, transform_indices = @transform_2, window_bounds = array<i64: 3, 32, 128>}, {pipeline_mode = #tpu.pipeline_mode<synchronous>, transform_indices = @transform_3, window_bounds = array<i64: 1, 128>}, {pipeline_mode = #tpu.pipeline_mode<synchronous>, transform_indices = @transform_4, window_bounds = array<i64: 2, 16, 128>}]} {
    %0 = tpu.iota {dimensions = array<i32: 1>} : vector<16x32xi32>
    %1 = tpu.iota {dimensions = array<i32: 0>} : vector<16x32xi32>
    %2 = arith.sitofp %1 : vector<16x32xi32> to vector<16x32xf32>
    %cst = arith.constant 2.000000e+00 : f32
    %3 = vector.broadcast %cst : f32 to vector<16x32xf32>
    %4 = arith.mulf %3, %2 : vector<16x32xf32>
    %cst_0 = arith.constant 1.500000e+01 : f32
    %5 = vector.broadcast %cst_0 : f32 to vector<16x32xf32>
    %6 = arith.divf %4, %5 : vector<16x32xf32>
    %cst_1 = arith.constant 1.000000e+00 : f32
    %7 = vector.broadcast %cst_1 : f32 to vector<16x32xf32>
    %8 = arith.subf %6, %7 : vector<16x32xf32>
    %c16_i32 = arith.constant 16 : i32
    %9 = vector.broadcast %c16_i32 : i32 to vector<16x32xi32>
    %10 = arith.subi %0, %9 : vector<16x32xi32>
    %11 = arith.sitofp %10 : vector<16x32xi32> to vector<16x32xf32>
    %cst_2 = arith.constant 2.000000e+00 : f32
    %12 = vector.broadcast %cst_2 : f32 to vector<16x32xf32>
    %13 = arith.mulf %12, %11 : vector<16x32xf32>
    %cst_3 = arith.constant 1.500000e+01 : f32
    %14 = vector.broadcast %cst_3 : f32 to vector<16x32xf32>
    %15 = arith.divf %13, %14 : vector<16x32xf32>
    %cst_4 = arith.constant 1.000000e+00 : f32
    %16 = vector.broadcast %cst_4 : f32 to vector<16x32xf32>
    %17 = arith.subf %15, %16 : vector<16x32xf32>
    %c16_i32_5 = arith.constant 16 : i32
    %18 = vector.broadcast %c16_i32_5 : i32 to vector<16x32xi32>
    %19 = arith.cmpi slt, %0, %18 : vector<16x32xi32>
    %20 = arith.select %19, %8, %17 : vector<16x32xi1>, vector<16x32xf32>
    %21 = tpu.iota {dimensions = array<i32: 0>} : vector<16x16xi32>
    %22 = tpu.iota {dimensions = array<i32: 1>} : vector<16x16xi32>
    %23 = arith.subi %22, %21 : vector<16x16xi32>
    %c-1_i32 = arith.constant -1 : i32
    %24 = vector.broadcast %c-1_i32 : i32 to vector<16x16xi32>
    %25 = arith.cmpi eq, %23, %24 : vector<16x16xi32>
    %26 = arith.extui %25 : vector<16x16xi1> to vector<16x16xi32>
    %27 = arith.sitofp %26 : vector<16x16xi32> to vector<16x16xf32>
    %28 = arith.subi %22, %21 : vector<16x16xi32>
    %c1_i32 = arith.constant 1 : i32
    %29 = vector.broadcast %c1_i32 : i32 to vector<16x16xi32>
    %30 = arith.cmpi eq, %28, %29 : vector<16x16xi32>
    %31 = arith.extui %30 : vector<16x16xi1> to vector<16x16xi32>
    %32 = arith.sitofp %31 : vector<16x16xi32> to vector<16x16xf32>
    %c0 = arith.constant 0 : index
    %c0_6 = arith.constant 0 : index
    %33 = vector.load %arg4[%c0, %c0_6] : memref<1x128xf32, #tpu.memory_space<vmem>>, vector<1x128xf32>
    %34 = vector.shape_cast %33 : vector<1x128xf32> to vector<1x128xf32>
    %35 = vector.broadcast %34 : vector<1x128xf32> to vector<16x128xf32>
    %cst_7 = arith.constant dense<0.000000e+00> : vector<16x32xf32>
    %36 = tpu.matmul %27, %20, %cst_7 {dimension_numbers = #tpu.dot_dimension_numbers<[1], [0], [0], [1], [0, 0, 1, 1], [], []>} : vector<16x16xf32>, vector<16x32xf32>, vector<16x32xf32> -> vector<16x32xf32>
    %c0_8 = arith.constant 0 : index
    %c0_9 = arith.constant 0 : index
    %c0_10 = arith.constant 0 : index
    %37 = vector.load %arg3[%c0_8, %c0_9, %c0_10] : memref<3x32x128xf32, #tpu.memory_space<vmem>>, vector<1x32x128xf32>
    %38 = vector.shape_cast %37 : vector<1x32x128xf32> to vector<32x128xf32>
    %cst_11 = arith.constant dense<0.000000e+00> : vector<16x128xf32>
    %39 = tpu.matmul %36, %38, %cst_11 {dimension_numbers = #tpu.dot_dimension_numbers<[1], [0], [0], [1], [0, 0, 1, 1], [], []>} : vector<16x32xf32>, vector<32x128xf32>, vector<16x128xf32> -> vector<16x128xf32>
    %40 = arith.addf %35, %39 : vector<16x128xf32>
    %c1 = arith.constant 1 : index
    %c0_12 = arith.constant 0 : index
    %c0_13 = arith.constant 0 : index
    %41 = vector.load %arg3[%c1, %c0_12, %c0_13] : memref<3x32x128xf32, #tpu.memory_space<vmem>>, vector<1x32x128xf32>
    %42 = vector.shape_cast %41 : vector<1x32x128xf32> to vector<32x128xf32>
    %cst_14 = arith.constant dense<0.000000e+00> : vector<16x128xf32>
    %43 = tpu.matmul %20, %42, %cst_14 {dimension_numbers = #tpu.dot_dimension_numbers<[1], [0], [0], [1], [0, 0, 1, 1], [], []>} : vector<16x32xf32>, vector<32x128xf32>, vector<16x128xf32> -> vector<16x128xf32>
    %44 = arith.addf %40, %43 : vector<16x128xf32>
    %cst_15 = arith.constant dense<0.000000e+00> : vector<16x32xf32>
    %45 = tpu.matmul %32, %20, %cst_15 {dimension_numbers = #tpu.dot_dimension_numbers<[1], [0], [0], [1], [0, 0, 1, 1], [], []>} : vector<16x16xf32>, vector<16x32xf32>, vector<16x32xf32> -> vector<16x32xf32>
    %c2 = arith.constant 2 : index
    %c0_16 = arith.constant 0 : index
    %c0_17 = arith.constant 0 : index
    %46 = vector.load %arg3[%c2, %c0_16, %c0_17] : memref<3x32x128xf32, #tpu.memory_space<vmem>>, vector<1x32x128xf32>
    %47 = vector.shape_cast %46 : vector<1x32x128xf32> to vector<32x128xf32>
    %cst_18 = arith.constant dense<0.000000e+00> : vector<16x128xf32>
    %48 = tpu.matmul %45, %47, %cst_18 {dimension_numbers = #tpu.dot_dimension_numbers<[1], [0], [0], [1], [0, 0, 1, 1], [], []>} : vector<16x32xf32>, vector<32x128xf32>, vector<16x128xf32> -> vector<16x128xf32>
    %49 = arith.addf %44, %48 : vector<16x128xf32>
    %c0_19 = arith.constant 0 : index
    %c0_20 = arith.constant 0 : index
    %c0_21 = arith.constant 0 : index
    %50 = vector.load %arg1[%c0_19, %c0_20, %c0_21] : memref<2x16x64xf32, #tpu.memory_space<vmem>>, vector<1x16x64xf32>
    %51 = vector.shape_cast %50 : vector<1x16x64xf32> to vector<16x64xf32>
    %cst_22 = arith.constant dense<0.000000e+00> : vector<16x64xf32>
    %52 = tpu.matmul %27, %51, %cst_22 {dimension_numbers = #tpu.dot_dimension_numbers<[1], [0], [0], [1], [0, 0, 1, 1], [], []>} : vector<16x16xf32>, vector<16x64xf32>, vector<16x64xf32> -> vector<16x64xf32>
    %c0_23 = arith.constant 0 : index
    %c0_24 = arith.constant 0 : index
    %c0_25 = arith.constant 0 : index
    %53 = vector.load %arg2[%c0_23, %c0_24, %c0_25] : memref<3x64x128xf32, #tpu.memory_space<vmem>>, vector<1x64x128xf32>
    %54 = vector.shape_cast %53 : vector<1x64x128xf32> to vector<64x128xf32>
    %cst_26 = arith.constant dense<0.000000e+00> : vector<16x128xf32>
    %55 = tpu.matmul %52, %54, %cst_26 {dimension_numbers = #tpu.dot_dimension_numbers<[1], [0], [0], [1], [0, 0, 1, 1], [], []>} : vector<16x64xf32>, vector<64x128xf32>, vector<16x128xf32> -> vector<16x128xf32>
    %56 = arith.addf %49, %55 : vector<16x128xf32>
    %c1_27 = arith.constant 1 : index
    %c0_28 = arith.constant 0 : index
    %c0_29 = arith.constant 0 : index
    %57 = vector.load %arg2[%c1_27, %c0_28, %c0_29] : memref<3x64x128xf32, #tpu.memory_space<vmem>>, vector<1x64x128xf32>
    %58 = vector.shape_cast %57 : vector<1x64x128xf32> to vector<64x128xf32>
    %cst_30 = arith.constant dense<0.000000e+00> : vector<16x128xf32>
    %59 = tpu.matmul %51, %58, %cst_30 {dimension_numbers = #tpu.dot_dimension_numbers<[1], [0], [0], [1], [0, 0, 1, 1], [], []>} : vector<16x64xf32>, vector<64x128xf32>, vector<16x128xf32> -> vector<16x128xf32>
    %60 = arith.addf %56, %59 : vector<16x128xf32>
    %cst_31 = arith.constant dense<0.000000e+00> : vector<16x64xf32>
    %61 = tpu.matmul %32, %51, %cst_31 {dimension_numbers = #tpu.dot_dimension_numbers<[1], [0], [0], [1], [0, 0, 1, 1], [], []>} : vector<16x16xf32>, vector<16x64xf32>, vector<16x64xf32> -> vector<16x64xf32>
    %c2_32 = arith.constant 2 : index
    %c0_33 = arith.constant 0 : index
    %c0_34 = arith.constant 0 : index
    %62 = vector.load %arg2[%c2_32, %c0_33, %c0_34] : memref<3x64x128xf32, #tpu.memory_space<vmem>>, vector<1x64x128xf32>
    %63 = vector.shape_cast %62 : vector<1x64x128xf32> to vector<64x128xf32>
    %cst_35 = arith.constant dense<0.000000e+00> : vector<16x128xf32>
    %64 = tpu.matmul %61, %63, %cst_35 {dimension_numbers = #tpu.dot_dimension_numbers<[1], [0], [0], [1], [0, 0, 1, 1], [], []>} : vector<16x64xf32>, vector<64x128xf32>, vector<16x128xf32> -> vector<16x128xf32>
    %65 = arith.addf %60, %64 : vector<16x128xf32>
    %c0_36 = arith.constant 0 : index
    %c0_37 = arith.constant 0 : index
    %c0_38 = arith.constant 0 : index
    %66 = vector.load %arg5[%c0_36, %c0_37, %c0_38] : memref<2x16x128xf32, #tpu.memory_space<vmem>>, vector<1x16x128xf32>
    %67 = vector.shape_cast %66 : vector<1x16x128xf32> to vector<16x128xf32>
    %68 = vector.shape_cast %65 : vector<16x128xf32> to vector<1x16x128xf32>
    tpu.vector_store %arg5[%c0_36, %c0_37, %c0_38], %68 {strides = array<i32>} : memref<2x16x128xf32, #tpu.memory_space<vmem>>, vector<1x16x128xf32>,
    %c1_39 = arith.constant 1 : index
    %c0_40 = arith.constant 0 : index
    %c0_41 = arith.constant 0 : index
    %69 = vector.load %arg1[%c1_39, %c0_40, %c0_41] : memref<2x16x64xf32, #tpu.memory_space<vmem>>, vector<1x16x64xf32>
    %70 = vector.shape_cast %69 : vector<1x16x64xf32> to vector<16x64xf32>
    %cst_42 = arith.constant dense<0.000000e+00> : vector<16x64xf32>
    %71 = tpu.matmul %27, %70, %cst_42 {dimension_numbers = #tpu.dot_dimension_numbers<[1], [0], [0], [1], [0, 0, 1, 1], [], []>} : vector<16x16xf32>, vector<16x64xf32>, vector<16x64xf32> -> vector<16x64xf32>
    %c0_43 = arith.constant 0 : index
    %c0_44 = arith.constant 0 : index
    %c0_45 = arith.constant 0 : index
    %72 = vector.load %arg2[%c0_43, %c0_44, %c0_45] : memref<3x64x128xf32, #tpu.memory_space<vmem>>, vector<1x64x128xf32>
    %73 = vector.shape_cast %72 : vector<1x64x128xf32> to vector<64x128xf32>
    %cst_46 = arith.constant dense<0.000000e+00> : vector<16x128xf32>
    %74 = tpu.matmul %71, %73, %cst_46 {dimension_numbers = #tpu.dot_dimension_numbers<[1], [0], [0], [1], [0, 0, 1, 1], [], []>} : vector<16x64xf32>, vector<64x128xf32>, vector<16x128xf32> -> vector<16x128xf32>
    %75 = arith.addf %49, %74 : vector<16x128xf32>
    %c1_47 = arith.constant 1 : index
    %c0_48 = arith.constant 0 : index
    %c0_49 = arith.constant 0 : index
    %76 = vector.load %arg2[%c1_47, %c0_48, %c0_49] : memref<3x64x128xf32, #tpu.memory_space<vmem>>, vector<1x64x128xf32>
    %77 = vector.shape_cast %76 : vector<1x64x128xf32> to vector<64x128xf32>
    %cst_50 = arith.constant dense<0.000000e+00> : vector<16x128xf32>
    %78 = tpu.matmul %70, %77, %cst_50 {dimension_numbers = #tpu.dot_dimension_numbers<[1], [0], [0], [1], [0, 0, 1, 1], [], []>} : vector<16x64xf32>, vector<64x128xf32>, vector<16x128xf32> -> vector<16x128xf32>
    %79 = arith.addf %75, %78 : vector<16x128xf32>
    %cst_51 = arith.constant dense<0.000000e+00> : vector<16x64xf32>
    %80 = tpu.matmul %32, %70, %cst_51 {dimension_numbers = #tpu.dot_dimension_numbers<[1], [0], [0], [1], [0, 0, 1, 1], [], []>} : vector<16x16xf32>, vector<16x64xf32>, vector<16x64xf32> -> vector<16x64xf32>
    %c2_52 = arith.constant 2 : index
    %c0_53 = arith.constant 0 : index
    %c0_54 = arith.constant 0 : index
    %81 = vector.load %arg2[%c2_52, %c0_53, %c0_54] : memref<3x64x128xf32, #tpu.memory_space<vmem>>, vector<1x64x128xf32>
    %82 = vector.shape_cast %81 : vector<1x64x128xf32> to vector<64x128xf32>
    %cst_55 = arith.constant dense<0.000000e+00> : vector<16x128xf32>
    %83 = tpu.matmul %80, %82, %cst_55 {dimension_numbers = #tpu.dot_dimension_numbers<[1], [0], [0], [1], [0, 0, 1, 1], [], []>} : vector<16x64xf32>, vector<64x128xf32>, vector<16x128xf32> -> vector<16x128xf32>
    %84 = arith.addf %79, %83 : vector<16x128xf32>
    %c1_56 = arith.constant 1 : index
    %c0_57 = arith.constant 0 : index
    %c0_58 = arith.constant 0 : index
    %85 = vector.load %arg5[%c1_56, %c0_57, %c0_58] : memref<2x16x128xf32, #tpu.memory_space<vmem>>, vector<1x16x128xf32>
    %86 = vector.shape_cast %85 : vector<1x16x128xf32> to vector<16x128xf32>
    %87 = vector.shape_cast %84 : vector<16x128xf32> to vector<1x16x128xf32>
    tpu.vector_store %arg5[%c1_56, %c0_57, %c0_58], %87 {strides = array<i32>} : memref<2x16x128xf32, #tpu.memory_space<vmem>>, vector<1x16x128xf32>,
    return
  }
  func.func @transform_0(%arg0: i32) -> (i32, i32, i32) {
    %c0_i32 = arith.constant 0 : i32
    %c0_i32_0 = arith.constant 0 : i32
    %c0_i32_1 = arith.constant 0 : i32
    %c0_i32_2 = arith.constant 0 : i32
    return %c0_i32, %c0_i32_0, %c0_i32_1 : i32, i32, i32
  }
  func.func @transform_1(%arg0: i32) -> (i32, i32, i32) {
    %c0_i32 = arith.constant 0 : i32
    %c0_i32_0 = arith.constant 0 : i32
    %c0_i32_1 = arith.constant 0 : i32
    %c0_i32_2 = arith.constant 0 : i32
    return %c0_i32, %c0_i32_0, %c0_i32_1 : i32, i32, i32
  }
  func.func @transform_2(%arg0: i32) -> (i32, i32, i32) {
    %c0_i32 = arith.constant 0 : i32
    %c0_i32_0 = arith.constant 0 : i32
    %c0_i32_1 = arith.constant 0 : i32
    %c0_i32_2 = arith.constant 0 : i32
    return %c0_i32, %c0_i32_0, %c0_i32_1 : i32, i32, i32
  }
  func.func @transform_3(%arg0: i32) -> (i32, i32) {
    %c0_i32 = arith.constant 0 : i32
    %c0_i32_0 = arith.constant 0 : i32
    %c0_i32_1 = arith.constant 0 : i32
    return %c0_i32, %c0_i32_0 : i32, i32
  }
  func.func @transform_4(%arg0: i32) -> (i32, i32, i32) {
    %c0_i32 = arith.constant 0 : i32
    %c0_i32_0 = arith.constant 0 : i32
    %c0_i32_1 = arith.constant 0 : i32
    %c0_i32_2 = arith.constant 0 : i32
    return %c0_i32, %c0_i32_0, %c0_i32_1 : i32, i32, i32
  }
}

</mosaic_0001>

<llo_original>
// kernel: tile.8
$region0: #{tile.8}
  #allocation0 [shape = 's32[1]{0}', space=sflag, size = 0x4, scoped, tag = 'scoped memory for tile.8']
  %s0 = inlined_call_operand.vmem [shape: f32[8], index: 0, kind: input, shape index: {}]
  %s1 = inlined_call_operand.vmem [shape: f32[16,8], index: 1, kind: output, shape index: {}]
  // Predicated region
  $region2: #{tile.8} parent=0 // pred_check
    _
  $region3: #{tile.8} parent=0 // pred_check_branch
    %3 = sbr.rel (0) target = $region5
  $region4: #{tile.8} parent=0 // pred_region
    _
  $region5: #{tile.8} parent=0 // pred_fallthru
    _
  %v4 = vld [vmem:[%s0] ss:$0 sm:$0xff]
  %5 = vst [vmem:[%s1] sm:$0xff] %v4
  %s6 = scalar_lea.vmem %s1, 8
  %7 = vst [vmem:[%s6] sm:$0xff] %v4

// kernel: tile.9
$region0: #{tile.9}
  %s0 = inlined_call_operand.vmem [shape: f32[16,8], index: 0, kind: input, shape index: {}]
  %s1 = inlined_call_operand.vmem [shape: f32[1,128], index: 1, kind: output, shape index: {}]
  $region1: #{tile.9} parent=0
    #allocation0 [shape = 'u8[4096]{0}', space=vmem, size = 0x1000, scoped, tag = 'scoped mem for output reshape']
    %v2 = vld [vmem:[%s0] sm:$0x1]
    %vm3 = vcmask 64512
    %4 = vst.msk [vmem:[#allocation0] sm:$0x1] %vm3, %v2
    %s5 = scalar_lea.vmem %s0, 15
    %v6 = vld [vmem:[%s5] sm:$0x1]
    %7 = vrot.lane.b32.xlu0 %v6, 120
    %v8 = vpop.permute.xlu0 %7
    %vm9 = vcmask 1048512
    %10 = vst.msk [vmem:[#allocation0] sm:$0x1] %vm9, %v8
    %s11 = scalar_lea.vmem %s0, 14
    %v12 = vld [vmem:[%s11] sm:$0x1]
    %13 = vrot.lane.b32.xlu0 %v12, 112
    %v14 = vpop.permute.xlu0 %13
    %vm15 = vcmask 982912
    %16 = vst.msk [vmem:[#allocation0] sm:$0x1] %vm15, %v14
    %s17 = scalar_lea.vmem %s0, 13
    %v18 = vld [vmem:[%s17] sm:$0x1]
    %19 = vrot.lane.b32.xlu0 %v18, 104
    %v20 = vpop.permute.xlu0 %19
    %vm21 = vcmask 917312
    %22 = vst.msk [vmem:[#allocation0] sm:$0x1] %vm21, %v20
    %s23 = scalar_lea.vmem %s0, 12
    %v24 = vld [vmem:[%s23] sm:$0x1]
    %25 = vrot.lane.b32.xlu0 %v24, 96
    %v26 = vpop.permute.xlu0 %25
    %vm27 = vcmask 851712
    %28 = vst.msk [vmem:[#allocation0] sm:$0x1] %vm27, %v26
    %s29 = scalar_lea.vmem %s0, 11
    %v30 = vld [vmem:[%s29] sm:$0x1]
    %31 = vrot.lane.b32.xlu0 %v30, 88
    %v32 = vpop.permute.xlu0 %31
    %vm33 = vcmask 786112
    %34 = vst.msk [vmem:[#allocation0] sm:$0x1] %vm33, %v32
    %s35 = scalar_lea.vmem %s0, 10
    %v36 = vld [vmem:[%s35] sm:$0x1]
    %37 = vrot.lane.b32.xlu0 %v36, 80
    %v38 = vpop.permute.xlu0 %37
    %vm39 = vcmask 720512
    %40 = vst.msk [vmem:[#allocation0] sm:$0x1] %vm39, %v38
    %s41 = scalar_lea.vmem %s0, 9
    %v42 = vld [vmem:[%s41] sm:$0x1]
    %43 = vrot.lane.b32.xlu0 %v42, 72
    %v44 = vpop.permute.xlu0 %43
    %vm45 = vcmask 654912
    %46 = vst.msk [vmem:[#allocation0] sm:$0x1] %vm45, %v44
    %s47 = scalar_lea.vmem %s0, 8
    %v48 = vld [vmem:[%s47] sm:$0x1]
    %49 = vrot.lane.b32.xlu0 %v48, 64
    %v50 = vpop.permute.xlu0 %49
    %vm51 = vcmask 589312
    %52 = vst.msk [vmem:[#allocation0] sm:$0x1] %vm51, %v50
    %s53 = scalar_lea.vmem %s0, 7
    %v54 = vld [vmem:[%s53] sm:$0x1]
    %55 = vrot.lane.b32.xlu0 %v54, 56
    %v56 = vpop.permute.xlu0 %55
    %vm57 = vcmask 523712
    %58 = vst.msk [vmem:[#allocation0] sm:$0x1] %vm57, %v56
    %s59 = scalar_lea.vmem %s0, 6
    %v60 = vld [vmem:[%s59] sm:$0x1]
    %61 = vrot.lane.b32.xlu0 %v60, 48
    %v62 = vpop.permute.xlu0 %61
    %vm63 = vcmask 458112
    %64 = vst.msk [vmem:[#allocation0] sm:$0x1] %vm63, %v62
    %s65 = scalar_lea.vmem %s0, 5
    %v66 = vld [vmem:[%s65] sm:$0x1]
    %67 = vrot.lane.b32.xlu0 %v66, 40
    %v68 = vpop.permute.xlu0 %67
    %vm69 = vcmask 392512
    %70 = vst.msk [vmem:[#allocation0] sm:$0x1] %vm69, %v68
    %s71 = scalar_lea.vmem %s0, 4
    %v72 = vld [vmem:[%s71] sm:$0x1]
    %73 = vrot.lane.b32.xlu0 %v72, 32
    %v74 = vpop.permute.xlu0 %73
    %vm75 = vcmask 326912
    %76 = vst.msk [vmem:[#allocation0] sm:$0x1] %vm75, %v74
    %s77 = scalar_lea.vmem %s0, 3
    %v78 = vld [vmem:[%s77] sm:$0x1]
    %79 = vrot.lane.b32.xlu0 %v78, 24
    %v80 = vpop.permute.xlu0 %79
    %vm81 = vcmask 261312
    %82 = vst.msk [vmem:[#allocation0] sm:$0x1] %vm81, %v80
    %s83 = scalar_lea.vmem %s0, 2
    %v84 = vld [vmem:[%s83] sm:$0x1]
    %85 = vrot.lane.b32.xlu0 %v84, 16
    %v86 = vpop.permute.xlu0 %85
    %vm87 = vcmask 195712
    %88 = vst.msk [vmem:[#allocation0] sm:$0x1] %vm87, %v86
    %s89 = scalar_lea.vmem %s0, 1
    %v90 = vld [vmem:[%s89] sm:$0x1]
    %91 = vrot.lane.b32.xlu0 %v90, 8
    %v92 = vpop.permute.xlu0 %91
    %vm93 = vcmask 130112
    %94 = vst.msk [vmem:[#allocation0] sm:$0x1] %vm93, %v92
    %s96 = sshllo.u32 0, 1
    %v98 = vld [vmem:[#allocation0] sm:%s96]
    %s99 = sshllo.u32 0, 1
    %100 = vst [vmem:[%s1] sm:%s99] %v98

// kernel: coord_conv_forward.1
$region0: #{coord_conv_forward.1}
  #allocation0 [shape = 'u32[]', space=smem, size = 0x4, offset = 0x4, fixed_abs, tag = 'smem constant byte address 0x4 - core index']
  #allocation1 [shape = 'u32[144,128]{1,0:T(1,128)}', space=vmem, size = 0x12000, scoped, tag = 'internal scratch']
  %s0 = inlined_call_operand.vmem [shape: f32[2,16,64], index: 0, kind: input, shape index: {}]
  %s1 = inlined_call_operand.vmem [shape: f32[3,64,128], index: 1, kind: input, shape index: {}]
  %s2 = inlined_call_operand.vmem [shape: f32[3,32,128], index: 2, kind: input, shape index: {}]
  %s3 = inlined_call_operand.vmem [shape: f32[1,128], index: 3, kind: input, shape index: {}]
  %s4 = inlined_call_operand.vmem [shape: f32[2,16,128], index: 4, kind: output, shape index: {}]
  %s5 = sld [smem:[#allocation0]]
  $region26: #{coord_conv_forward.1} parent=0
    _
  %s7 = ssub.s32 1, %s5
  %s8 = scalar_select 0, %s7, %s5
  // Predicated region
  $region2: #{coord_conv_forward.1} parent=0 // pred_check
    _
  $region3: #{coord_conv_forward.1} parent=0 // pred_check_branch
    %10 = sbr.rel (0) target = $region5
  $region4: #{coord_conv_forward.1} parent=0 // pred_region
    _
  $region5: #{coord_conv_forward.1} parent=0 // pred_fallthru
    _
  // Predicated region
  $region6: #{coord_conv_forward.1} parent=0 // pred_check
    _
  $region7: #{coord_conv_forward.1} parent=0 // pred_check_branch
    %12 = sbr.rel (0) target = $region9
  $region8: #{coord_conv_forward.1} parent=0 // pred_region
    _
  $region9: #{coord_conv_forward.1} parent=0 // pred_fallthru
    _
  // Predicated region
  $region10: #{coord_conv_forward.1} parent=0 // pred_check
    _
  $region11: #{coord_conv_forward.1} parent=0 // pred_check_branch
    %14 = sbr.rel (0) target = $region13
  $region12: #{coord_conv_forward.1} parent=0 // pred_region
    _
  $region13: #{coord_conv_forward.1} parent=0 // pred_fallthru
    _
  // Predicated region
  $region14: #{coord_conv_forward.1} parent=0 // pred_check
    _
  $region15: #{coord_conv_forward.1} parent=0 // pred_check_branch
    %16 = sbr.rel (0) target = $region17
  $region16: #{coord_conv_forward.1} parent=0 // pred_region
    _
  $region17: #{coord_conv_forward.1} parent=0 // pred_fallthru
    _
  %v17 = vlaneseq
  %v18 = vand.u32 %v17, 127
  %v19 = vlaneseq
  %v20 = vshrl.u32 %v19, 7
  %v21 = vadd.s32 %v20, 8
  %v22 = vcvt.s32.f32 %v20
  %v23 = vcvt.s32.f32 %v21
  %v24 = vmul.f32 %v22, 2.0
  %v25 = vmul.f32 %v23, 2.0
  %v26 = vrcp.pop 15.0
  %v27 = vmul.f32 %v24, %v26
  %v28 = vmul.f32 %v25, %v26
  %v29 = vsub.f32 %v27, 1.0
  %v30 = vsub.f32 %v28, 1.0
  %v31 = vsub.s32 %v18, 16
  %v32 = vcvt.s32.f32 %v31
  %v33 = vmul.f32 %v32, 2.0
  %v34 = vmul.f32 %v33, %v26
  %v35 = vsub.f32 %v34, 1.0
  %vm36 = vcmp.lt.s32.totalorder %v18, 16
  %v37 = vsel %vm36, %v29, %v35
  %v38 = vsel %vm36, %v30, %v35
  %v39 = vsub.s32 %v18, %v20
  %v40 = vsub.s32 %v18, %v21
  %vm41 = vcmp.eq.s32.totalorder %v39, 4294967295
  %vm42 = vcmp.eq.s32.totalorder %v40, 4294967295
  %v43 = vsel %vm41, 1, 0
  %v44 = vsel %vm42, 1, 0
  %v45 = vcvt.s32.f32 %v43
  %v46 = vcvt.s32.f32 %v44
  %vm47 = vcmp.eq.s32.totalorder %v39, 1
  %vm48 = vcmp.eq.s32.totalorder %v40, 1
  %v49 = vsel %vm47, 1, 0
  %v50 = vsel %vm48, 1, 0
  %v51 = vcvt.s32.f32 %v49
  %v52 = vcvt.s32.f32 %v50
  %v53 = vld [vmem:[%s3] sm:$0x1]
  %v55 = vlaneseq
  %v56 = vshrl.u32 %v55, 7
  %v57 = vsub.s32 0, %v56
  %v58 = vrot.slane %v53, %v57
  %vm60 = vcmask 130048
  %v62 = vsel %vm60, %v45, 0
  %v65 = vsel %vm60, %v46, 0
  %67 = vmatprep.subr.mxu0 0.0
  %68 = vmatpush1.msra.mxu0 %v37
  %69 = vmatprep.subr.mxu0 0.0
  %70 = vmatpush1.msra.mxu0 %v38
  %71 = vmatprep.subr.mxu0 0.0
  %72 = vmatpush1.msra.mxu0 0.0
  %73 = vmatprep.subr.mxu0 0.0
  %74 = vmatpush1.msra.mxu0 0.0
  %75 = vmatprep.subr.mxu0 0.0
  %76 = vmatpush1.msra.mxu0 0.0
  %77 = vmatprep.subr.mxu0 0.0
  %78 = vmatpush1.msra.mxu0 0.0
  %79 = vmatprep.subr.mxu0 0.0
  %80 = vmatpush1.msra.mxu0 0.0
  %81 = vmatprep.subr.mxu0 0.0
  %82 = vmatpush1.msra.mxu0 0.0
  %83 = vmatprep.subr.mxu0 0.0
  %84 = vmatpush1.msra.mxu0 0.0
  %85 = vmatprep.subr.mxu0 0.0
  %86 = vmatpush1.msra.mxu0 0.0
  %87 = vmatprep.subr.mxu0 0.0
  %88 = vmatpush1.msra.mxu0 0.0
  %89 = vmatprep.subr.mxu0 0.0
  %90 = vmatpush1.msra.mxu0 0.0
  %91 = vmatprep.subr.mxu0 0.0
  %92 = vmatpush1.msra.mxu0 0.0
  %93 = vmatprep.subr.mxu0 0.0
  %94 = vmatpush1.msra.mxu0 0.0
  %95 = vmatprep.subr.mxu0 0.0
  %96 = vmatpush1.msra.mxu0 0.0
  %97 = vmatprep.subr.mxu0 0.0
  %98 = vmatpush1.msra.mxu0 0.0
  %99 = vmatprep.subr.mxu0 0.0
  %100 = vmatpush1.msra.mxu0 0.0
  %101 = vmatprep.subr.mxu0 0.0
  %102 = vmatpush1.msra.mxu0 0.0
  %103 = vmatprep.subr.mxu0 0.0
  %104 = vmatpush1.msra.mxu0 0.0
  %105 = vmatprep.subr.mxu0 0.0
  %106 = vmatpush1.msra.mxu0 0.0
  %107 = vmatprep.subr.mxu0 0.0
  %108 = vmatpush1.msra.mxu0 0.0
  %109 = vmatprep.subr.mxu0 0.0
  %110 = vmatpush1.msra.mxu0 0.0
  %111 = vmatprep.subr.mxu0 0.0
  %112 = vmatpush1.msra.mxu0 0.0
  %113 = vmatprep.subr.mxu0 0.0
  %114 = vmatpush1.msra.mxu0 0.0
  %115 = vmatprep.subr.mxu0 0.0
  %116 = vmatpush1.msra.mxu0 0.0
  %117 = vmatprep.subr.mxu0 0.0
  %118 = vmatpush1.msra.mxu0 0.0
  %119 = vmatprep.subr.mxu0 0.0
  %120 = vmatpush1.msra.mxu0 0.0
  %121 = vmatprep.subr.mxu0 0.0
  %122 = vmatpush1.msra.mxu0 0.0
  %123 = vmatprep.subr.mxu0 0.0
  %124 = vmatpush1.msra.mxu0 0.0
  %125 = vmatprep.subr.mxu0 0.0
  %126 = vmatpush1.msra.mxu0 0.0
  %127 = vmatprep.subr.mxu0 0.0
  %128 = vmatpush1.msra.mxu0 0.0
  %129 = vmatprep.subr.mxu0 0.0
  %130 = vmatpush1.msra.mxu0 0.0
  %131 = vmatprep.mubr.f32.mxu0 0.0
  %132 = vmatmul.mubr.f32.gmra.mrb[0].mxu0 %v62
  %v133 = vpop.f32.mrb[0].mxu0
  %v134 = vadd.f32 0.0, %v133
  %v135 = vpop.f32.mrb[0].mxu0
  %136 = vmatprep.mubr.f32.mxu0 0.0
  %137 = vmatmul.mubr.f32.gmra.mrb[0].mxu0 %v65
  %v138 = vpop.f32.mrb[0].mxu0
  %v139 = vadd.f32 0.0, %v138
  %v140 = vpop.f32.mrb[0].mxu0
  %141 = vdwg.mxu0
  %v142 = vld [vmem:[%s2] sm:$0xff]
  %v143 = vld [vmem:[%s2 + $0x8] sm:$0xff]
  %v144 = vld [vmem:[%s2 + $0x10] sm:$0xff]
  %v145 = vld [vmem:[%s2 + $0x18] sm:$0xff]
  %vm146 = vcmask 261120
  %v148 = vsel %vm146, %v134, 0
  %v151 = vsel %vm146, %v139, 0
  %153 = vmatprep.subr.mxu0 0.0
  %154 = vmatpush1.msra.mxu0 %v142
  %155 = vmatprep.subr.mxu0 0.0
  %156 = vmatpush1.msra.mxu0 %v143
  %157 = vmatprep.subr.mxu0 0.0
  %158 = vmatpush1.msra.mxu0 %v144
  %159 = vmatprep.subr.mxu0 0.0
  %160 = vmatpush1.msra.mxu0 %v145
  %161 = vmatprep.subr.mxu0 0.0
  %162 = vmatpush1.msra.mxu0 0.0
  %163 = vmatprep.subr.mxu0 0.0
  %164 = vmatpush1.msra.mxu0 0.0
  %165 = vmatprep.subr.mxu0 0.0
  %166 = vmatpush1.msra.mxu0 0.0
  %167 = vmatprep.subr.mxu0 0.0
  %168 = vmatpush1.msra.mxu0 0.0
  %169 = vmatprep.subr.mxu0 0.0
  %170 = vmatpush1.msra.mxu0 0.0
  %171 = vmatprep.subr.mxu0 0.0
  %172 = vmatpush1.msra.mxu0 0.0
  %173 = vmatprep.subr.mxu0 0.0
  %174 = vmatpush1.msra.mxu0 0.0
  %175 = vmatprep.subr.mxu0 0.0
  %176 = vmatpush1.msra.mxu0 0.0
  %177 = vmatprep.subr.mxu0 0.0
  %178 = vmatpush1.msra.mxu0 0.0
  %179 = vmatprep.subr.mxu0 0.0
  %180 = vmatpush1.msra.mxu0 0.0
  %181 = vmatprep.subr.mxu0 0.0
  %182 = vmatpush1.msra.mxu0 0.0
  %183 = vmatprep.subr.mxu0 0.0
  %184 = vmatpush1.msra.mxu0 0.0
  %185 = vmatprep.subr.mxu0 0.0
  %186 = vmatpush1.msra.mxu0 0.0
  %187 = vmatprep.subr.mxu0 0.0
  %188 = vmatpush1.msra.mxu0 0.0
  %189 = vmatprep.subr.mxu0 0.0
  %190 = vmatpush1.msra.mxu0 0.0
  %191 = vmatprep.subr.mxu0 0.0
  %192 = vmatpush1.msra.mxu0 0.0
  %193 = vmatprep.subr.mxu0 0.0
  %194 = vmatpush1.msra.mxu0 0.0
  %195 = vmatprep.subr.mxu0 0.0
  %196 = vmatpush1.msra.mxu0 0.0
  %197 = vmatprep.subr.mxu0 0.0
  %198 = vmatpush1.msra.mxu0 0.0
  %199 = vmatprep.subr.mxu0 0.0
  %200 = vmatpush1.msra.mxu0 0.0
  %201 = vmatprep.subr.mxu0 0.0
  %202 = vmatpush1.msra.mxu0 0.0
  %203 = vmatprep.subr.mxu0 0.0
  %204 = vmatpush1.msra.mxu0 0.0
  %205 = vmatprep.subr.mxu0 0.0
  %206 = vmatpush1.msra.mxu0 0.0
  %207 = vmatprep.subr.mxu0 0.0
  %208 = vmatpush1.msra.mxu0 0.0
  %209 = vmatprep.subr.mxu0 0.0
  %210 = vmatpush1.msra.mxu0 0.0
  %211 = vmatprep.subr.mxu0 0.0
  %212 = vmatpush1.msra.mxu0 0.0
  %213 = vmatprep.subr.mxu0 0.0
  %214 = vmatpush1.msra.mxu0 0.0
  %215 = vmatprep.subr.mxu0 0.0
  %216 = vmatpush1.msra.mxu0 0.0
  %217 = vmatprep.mubr.f32.mxu0 0.0
  %218 = vmatmul.mubr.f32.gmra.mrb[0].mxu0 %v148
  %v219 = vpop.f32.mrb[0].mxu0
  %v220 = vadd.f32 0.0, %v219
  %v221 = vpop.f32.mrb[0].mxu0
  %222 = vmatprep.mubr.f32.mxu0 0.0
  %223 = vmatmul.mubr.f32.gmra.mrb[0].mxu0 %v151
  %v224 = vpop.f32.mrb[0].mxu0
  %v225 = vadd.f32 0.0, %v224
  %v226 = vpop.f32.mrb[0].mxu0
  %227 = vdwg.mxu0
  %v228 = vadd.f32 %v58, %v220
  %v229 = vadd.f32 %v58, %v225
  %s230 = scalar_lea.vmem %s2, 32
  %v231 = vld [vmem:[%s230] sm:$0xff]
  %v232 = vld [vmem:[%s230 + $0x8] sm:$0xff]
  %v233 = vld [vmem:[%s230 + $0x10] sm:$0xff]
  %v234 = vld [vmem:[%s230 + $0x18] sm:$0xff]
  %v236 = vsel %vm146, %v37, 0
  %v239 = vsel %vm146, %v38, 0
  %241 = vmatprep.subr.mxu0 0.0
  %242 = vmatpush1.msra.mxu0 %v231
  %243 = vmatprep.subr.mxu0 0.0
  %244 = vmatpush1.msra.mxu0 %v232
  %245 = vmatprep.subr.mxu0 0.0
  %246 = vmatpush1.msra.mxu0 %v233
  %247 = vmatprep.subr.mxu0 0.0
  %248 = vmatpush1.msra.mxu0 %v234
  %249 = vmatprep.subr.mxu0 0.0
  %250 = vmatpush1.msra.mxu0 0.0
  %251 = vmatprep.subr.mxu0 0.0
  %252 = vmatpush1.msra.mxu0 0.0
  %253 = vmatprep.subr.mxu0 0.0
  %254 = vmatpush1.msra.mxu0 0.0
  %255 = vmatprep.subr.mxu0 0.0
  %256 = vmatpush1.msra.mxu0 0.0
  %257 = vmatprep.subr.mxu0 0.0
  %258 = vmatpush1.msra.mxu0 0.0
  %259 = vmatprep.subr.mxu0 0.0
  %260 = vmatpush1.msra.mxu0 0.0
  %261 = vmatprep.subr.mxu0 0.0
  %262 = vmatpush1.msra.mxu0 0.0
  %263 = vmatprep.subr.mxu0 0.0
  %264 = vmatpush1.msra.mxu0 0.0
  %265 = vmatprep.subr.mxu0 0.0
  %266 = vmatpush1.msra.mxu0 0.0
  %267 = vmatprep.subr.mxu0 0.0
  %268 = vmatpush1.msra.mxu0 0.0
  %269 = vmatprep.subr.mxu0 0.0
  %270 = vmatpush1.msra.mxu0 0.0
  %271 = vmatprep.subr.mxu0 0.0
  %272 = vmatpush1.msra.mxu0 0.0
  %273 = vmatprep.subr.mxu0 0.0
  %274 = vmatpush1.msra.mxu0 0.0
  %275 = vmatprep.subr.mxu0 0.0
  %276 = vmatpush1.msra.mxu0 0.0
  %277 = vmatprep.subr.mxu0 0.0
  %278 = vmatpush1.msra.mxu0 0.0
  %279 = vmatprep.subr.mxu0 0.0
  %280 = vmatpush1.msra.mxu0 0.0
  %281 = vmatprep.subr.mxu0 0.0
  %282 = vmatpush1.msra.mxu0 0.0
  %283 = vmatprep.subr.mxu0 0.0
  %284 = vmatpush1.msra.mxu0 0.0
  %285 = vmatprep.subr.mxu0 0.0
  %286 = vmatpush1.msra.mxu0 0.0
  %287 = vmatprep.subr.mxu0 0.0
  %288 = vmatpush1.msra.mxu0 0.0
  %289 = vmatprep.subr.mxu0 0.0
  %290 = vmatpush1.msra.mxu0 0.0
  %291 = vmatprep.subr.mxu0 0.0
  %292 = vmatpush1.msra.mxu0 0.0
  %293 = vmatprep.subr.mxu0 0.0
  %294 = vmatpush1.msra.mxu0 0.0
  %295 = vmatprep.subr.mxu0 0.0
  %296 = vmatpush1.msra.mxu0 0.0
  %297 = vmatprep.subr.mxu0 0.0
  %298 = vmatpush1.msra.mxu0 0.0
  %299 = vmatprep.subr.mxu0 0.0
  %300 = vmatpush1.msra.mxu0 0.0
  %301 = vmatprep.subr.mxu0 0.0
  %302 = vmatpush1.msra.mxu0 0.0
  %303 = vmatprep.subr.mxu0 0.0
  %304 = vmatpush1.msra.mxu0 0.0
  %305 = vmatprep.mubr.f32.mxu0 0.0
  %306 = vmatmul.mubr.f32.gmra.mrb[0].mxu0 %v236
  %v307 = vpop.f32.mrb[0].mxu0
  %v308 = vadd.f32 0.0, %v307
  %v309 = vpop.f32.mrb[0].mxu0
  %310 = vmatprep.mubr.f32.mxu0 0.0
  %311 = vmatmul.mubr.f32.gmra.mrb[0].mxu0 %v239
  %v312 = vpop.f32.mrb[0].mxu0
  %v313 = vadd.f32 0.0, %v312
  %v314 = vpop.f32.mrb[0].mxu0
  %315 = vdwg.mxu0
  %v316 = vadd.f32 %v228, %v308
  %v317 = vadd.f32 %v229, %v313
  %v319 = vsel %vm60, %v51, 0
  %v322 = vsel %vm60, %v52, 0
  %324 = vmatprep.subr.mxu0 0.0
  %325 = vmatpush1.msra.mxu0 %v37
  %326 = vmatprep.subr.mxu0 0.0
  %327 = vmatpush1.msra.mxu0 %v38
  %328 = vmatprep.subr.mxu0 0.0
  %329 = vmatpush1.msra.mxu0 0.0
  %330 = vmatprep.subr.mxu0 0.0
  %331 = vmatpush1.msra.mxu0 0.0
  %332 = vmatprep.subr.mxu0 0.0
  %333 = vmatpush1.msra.mxu0 0.0
  %334 = vmatprep.subr.mxu0 0.0
  %335 = vmatpush1.msra.mxu0 0.0
  %336 = vmatprep.subr.mxu0 0.0
  %337 = vmatpush1.msra.mxu0 0.0
  %338 = vmatprep.subr.mxu0 0.0
  %339 = vmatpush1.msra.mxu0 0.0
  %340 = vmatprep.subr.mxu0 0.0
  %341 = vmatpush1.msra.mxu0 0.0
  %342 = vmatprep.subr.mxu0 0.0
  %343 = vmatpush1.msra.mxu0 0.0
  %344 = vmatprep.subr.mxu0 0.0
  %345 = vmatpush1.msra.mxu0 0.0
  %346 = vmatprep.subr.mxu0 0.0
  %347 = vmatpush1.msra.mxu0 0.0
  %348 = vmatprep.subr.mxu0 0.0
  %349 = vmatpush1.msra.mxu0 0.0
  %350 = vmatprep.subr.mxu0 0.0
  %351 = vmatpush1.msra.mxu0 0.0
  %352 = vmatprep.subr.mxu0 0.0
  %353 = vmatpush1.msra.mxu0 0.0
  %354 = vmatprep.subr.mxu0 0.0
  %355 = vmatpush1.msra.mxu0 0.0
  %356 = vmatprep.subr.mxu0 0.0
  %357 = vmatpush1.msra.mxu0 0.0
  %358 = vmatprep.subr.mxu0 0.0
  %359 = vmatpush1.msra.mxu0 0.0
  %360 = vmatprep.subr.mxu0 0.0
  %361 = vmatpush1.msra.mxu0 0.0
  %362 = vmatprep.subr.mxu0 0.0
  %363 = vmatpush1.msra.mxu0 0.0
  %364 = vmatprep.subr.mxu0 0.0
  %365 = vmatpush1.msra.mxu0 0.0
  %366 = vmatprep.subr.mxu0 0.0
  %367 = vmatpush1.msra.mxu0 0.0
  %368 = vmatprep.subr.mxu0 0.0
  %369 = vmatpush1.msra.mxu0 0.0
  %370 = vmatprep.subr.mxu0 0.0
  %371 = vmatpush1.msra.mxu0 0.0
  %372 = vmatprep.subr.mxu0 0.0
  %373 = vmatpush1.msra.mxu0 0.0
  %374 = vmatprep.subr.mxu0 0.0
  %375 = vmatpush1.msra.mxu0 0.0
  %376 = vmatprep.subr.mxu0 0.0
  %377 = vmatpush1.msra.mxu0 0.0
  %378 = vmatprep.subr.mxu0 0.0
  %379 = vmatpush1.msra.mxu0 0.0
  %380 = vmatprep.subr.mxu0 0.0
  %381 = vmatpush1.msra.mxu0 0.0
  %382 = vmatprep.subr.mxu0 0.0
  %383 = vmatpush1.msra.mxu0 0.0
  %384 = vmatprep.subr.mxu0 0.0
  %385 = vmatpush1.msra.mxu0 0.0
  %386 = vmatprep.subr.mxu0 0.0
  %387 = vmatpush1.msra.mxu0 0.0
  %388 = vmatprep.mubr.f32.mxu0 0.0
  %389 = vmatmul.mubr.f32.gmra.mrb[0].mxu0 %v319
  %v390 = vpop.f32.mrb[0].mxu0
  %v391 = vadd.f32 0.0, %v390
  %v392 = vpop.f32.mrb[0].mxu0
  %393 = vmatprep.mubr.f32.mxu0 0.0
  %394 = vmatmul.mubr.f32.gmra.mrb[0].mxu0 %v322
  %v395 = vpop.f32.mrb[0].mxu0
  %v396 = vadd.f32 0.0, %v395
  %v397 = vpop.f32.mrb[0].mxu0
  %398 = vdwg.mxu0
  %s399 = scalar_lea.vmem %s2, 64
  %v400 = vld [vmem:[%s399] sm:$0xff]
  %v401 = vld [vmem:[%s399 + $0x8] sm:$0xff]
  %v402 = vld [vmem:[%s399 + $0x10] sm:$0xff]
  %v403 = vld [vmem:[%s399 + $0x18] sm:$0xff]
  %v405 = vsel %vm146, %v391, 0
  %v408 = vsel %vm146, %v396, 0
  %410 = vmatprep.subr.mxu0 0.0
  %411 = vmatpush1.msra.mxu0 %v400
  %412 = vmatprep.subr.mxu0 0.0
  %413 = vmatpush1.msra.mxu0 %v401
  %414 = vmatprep.subr.mxu0 0.0
  %415 = vmatpush1.msra.mxu0 %v402
  %416 = vmatprep.subr.mxu0 0.0
  %417 = vmatpush1.msra.mxu0 %v403
  %418 = vmatprep.subr.mxu0 0.0
  %419 = vmatpush1.msra.mxu0 0.0
  %420 = vmatprep.subr.mxu0 0.0
  %421 = vmatpush1.msra.mxu0 0.0
  %422 = vmatprep.subr.mxu0 0.0
  %423 = vmatpush1.msra.mxu0 0.0
  %424 = vmatprep.subr.mxu0 0.0
  %425 = vmatpush1.msra.mxu0 0.0
  %426 = vmatprep.subr.mxu0 0.0
  %427 = vmatpush1.msra.mxu0 0.0
  %428 = vmatprep.subr.mxu0 0.0
  %429 = vmatpush1.msra.mxu0 0.0
  %430 = vmatprep.subr.mxu0 0.0
  %431 = vmatpush1.msra.mxu0 0.0
  %432 = vmatprep.subr.mxu0 0.0
  %433 = vmatpush1.msra.mxu0 0.0
  %434 = vmatprep.subr.mxu0 0.0
  %435 = vmatpush1.msra.mxu0 0.0
  %436 = vmatprep.subr.mxu0 0.0
  %437 = vmatpush1.msra.mxu0 0.0
  %438 = vmatprep.subr.mxu0 0.0
  %439 = vmatpush1.msra.mxu0 0.0
  %440 = vmatprep.subr.mxu0 0.0
  %441 = vmatpush1.msra.mxu0 0.0
  %442 = vmatprep.subr.mxu0 0.0
  %443 = vmatpush1.msra.mxu0 0.0
  %444 = vmatprep.subr.mxu0 0.0
  %445 = vmatpush1.msra.mxu0 0.0
  %446 = vmatprep.subr.mxu0 0.0
  %447 = vmatpush1.msra.mxu0 0.0
  %448 = vmatprep.subr.mxu0 0.0
  %449 = vmatpush1.msra.mxu0 0.0
  %450 = vmatprep.subr.mxu0 0.0
  %451 = vmatpush1.msra.mxu0 0.0
  %452 = vmatprep.subr.mxu0 0.0
  %453 = vmatpush1.msra.mxu0 0.0
  %454 = vmatprep.subr.mxu0 0.0
  %455 = vmatpush1.msra.mxu0 0.0
  %456 = vmatprep.subr.mxu0 0.0
  %457 = vmatpush1.msra.mxu0 0.0
  %458 = vmatprep.subr.mxu0 0.0
  %459 = vmatpush1.msra.mxu0 0.0
  %460 = vmatprep.subr.mxu0 0.0
  %461 = vmatpush1.msra.mxu0 0.0
  %462 = vmatprep.subr.mxu0 0.0
  %463 = vmatpush1.msra.mxu0 0.0
  %464 = vmatprep.subr.mxu0 0.0
  %465 = vmatpush1.msra.mxu0 0.0
  %466 = vmatprep.subr.mxu0 0.0
  %467 = vmatpush1.msra.mxu0 0.0
  %468 = vmatprep.subr.mxu0 0.0
  %469 = vmatpush1.msra.mxu0 0.0
  %470 = vmatprep.subr.mxu0 0.0
  %471 = vmatpush1.msra.mxu0 0.0
  %472 = vmatprep.subr.mxu0 0.0
  %473 = vmatpush1.msra.mxu0 0.0
  %474 = vmatprep.mubr.f32.mxu0 0.0
  %475 = vmatmul.mubr.f32.gmra.mrb[0].mxu0 %v405
  %v476 = vpop.f32.mrb[0].mxu0
  %v477 = vadd.f32 0.0, %v476
  %v478 = vpop.f32.mrb[0].mxu0
  %479 = vmatprep.mubr.f32.mxu0 0.0
  %480 = vmatmul.mubr.f32.gmra.mrb[0].mxu0 %v408
  %v481 = vpop.f32.mrb[0].mxu0
  %v482 = vadd.f32 0.0, %v481
  %v483 = vpop.f32.mrb[0].mxu0
  %484 = vdwg.mxu0
  %v485 = vadd.f32 %v316, %v477
  %v486 = vadd.f32 %v317, %v482
  %v487 = vld [vmem:[%s0] sm:$0xff]
  %v488 = vld [vmem:[%s0 + $0x8] sm:$0xff]
  %489 = vmatprep.subr.mxu0 0.0
  %490 = vmatpush1.msra.mxu0 %v487
  %491 = vmatprep.subr.mxu0 0.0
  %492 = vmatpush1.msra.mxu0 %v488
  %493 = vmatprep.subr.mxu0 0.0
  %494 = vmatpush1.msra.mxu0 0.0
  %495 = vmatprep.subr.mxu0 0.0
  %496 = vmatpush1.msra.mxu0 0.0
  %497 = vmatprep.subr.mxu0 0.0
  %498 = vmatpush1.msra.mxu0 0.0
  %499 = vmatprep.subr.mxu0 0.0
  %500 = vmatpush1.msra.mxu0 0.0
  %501 = vmatprep.subr.mxu0 0.0
  %502 = vmatpush1.msra.mxu0 0.0
  %503 = vmatprep.subr.mxu0 0.0
  %504 = vmatpush1.msra.mxu0 0.0
  %505 = vmatprep.subr.mxu0 0.0
  %506 = vmatpush1.msra.mxu0 0.0
  %507 = vmatprep.subr.mxu0 0.0
  %508 = vmatpush1.msra.mxu0 0.0
  %509 = vmatprep.subr.mxu0 0.0
  %510 = vmatpush1.msra.mxu0 0.0
  %511 = vmatprep.subr.mxu0 0.0
  %512 = vmatpush1.msra.mxu0 0.0
  %513 = vmatprep.subr.mxu0 0.0
  %514 = vmatpush1.msra.mxu0 0.0
  %515 = vmatprep.subr.mxu0 0.0
  %516 = vmatpush1.msra.mxu0 0.0
  %517 = vmatprep.subr.mxu0 0.0
  %518 = vmatpush1.msra.mxu0 0.0
  %519 = vmatprep.subr.mxu0 0.0
  %520 = vmatpush1.msra.mxu0 0.0
  %521 = vmatprep.subr.mxu0 0.0
  %522 = vmatpush1.msra.mxu0 0.0
  %523 = vmatprep.subr.mxu0 0.0
  %524 = vmatpush1.msra.mxu0 0.0
  %525 = vmatprep.subr.mxu0 0.0
  %526 = vmatpush1.msra.mxu0 0.0
  %527 = vmatprep.subr.mxu0 0.0
  %528 = vmatpush1.msra.mxu0 0.0
  %529 = vmatprep.subr.mxu0 0.0
  %530 = vmatpush1.msra.mxu0 0.0
  %531 = vmatprep.subr.mxu0 0.0
  %532 = vmatpush1.msra.mxu0 0.0
  %533 = vmatprep.subr.mxu0 0.0
  %534 = vmatpush1.msra.mxu0 0.0
  %535 = vmatprep.subr.mxu0 0.0
  %536 = vmatpush1.msra.mxu0 0.0
  %537 = vmatprep.subr.mxu0 0.0
  %538 = vmatpush1.msra.mxu0 0.0
  %539 = vmatprep.subr.mxu0 0.0
  %540 = vmatpush1.msra.mxu0 0.0
  %541 = vmatprep.subr.mxu0 0.0
  %542 = vmatpush1.msra.mxu0 0.0
  %543 = vmatprep.subr.mxu0 0.0
  %544 = vmatpush1.msra.mxu0 0.0
  %545 = vmatprep.subr.mxu0 0.0
  %546 = vmatpush1.msra.mxu0 0.0
  %547 = vmatprep.subr.mxu0 0.0
  %548 = vmatpush1.msra.mxu0 0.0
  %549 = vmatprep.subr.mxu0 0.0
  %550 = vmatpush1.msra.mxu0 0.0
  %551 = vmatprep.subr.mxu0 0.0
  %552 = vmatpush1.msra.mxu0 0.0
  %553 = vmatprep.mubr.f32.mxu0 0.0
  %554 = vmatmul.mubr.f32.gmra.mrb[0].mxu0 %v62
  %v555 = vpop.f32.mrb[0].mxu0
  %v556 = vadd.f32 0.0, %v555
  %v557 = vpop.f32.mrb[0].mxu0
  %558 = vmatprep.mubr.f32.mxu0 0.0
  %559 = vmatmul.mubr.f32.gmra.mrb[0].mxu0 %v65
  %v560 = vpop.f32.mrb[0].mxu0
  %v561 = vadd.f32 0.0, %v560
  %v562 = vpop.f32.mrb[0].mxu0
  %563 = vdwg.mxu0
  %v564 = vld [vmem:[%s1] sm:$0xff]
  %v565 = vld [vmem:[%s1 + $0x8] sm:$0xff]
  %v566 = vld [vmem:[%s1 + $0x10] sm:$0xff]
  %v567 = vld [vmem:[%s1 + $0x18] sm:$0xff]
  %v568 = vld [vmem:[%s1 + $0x20] sm:$0xff]
  %v569 = vld [vmem:[%s1 + $0x28] sm:$0xff]
  %v570 = vld [vmem:[%s1 + $0x30] sm:$0xff]
  %v571 = vld [vmem:[%s1 + $0x38] sm:$0xff]
  %vm572 = vcmask 523264
  %v574 = vsel %vm572, %v556, 0
  %v577 = vsel %vm572, %v561, 0
  %579 = vmatprep.subr.mxu0 0.0
  %580 = vmatpush1.msra.mxu0 %v564
  %581 = vmatprep.subr.mxu0 0.0
  %582 = vmatpush1.msra.mxu0 %v565
  %583 = vmatprep.subr.mxu0 0.0
  %584 = vmatpush1.msra.mxu0 %v566
  %585 = vmatprep.subr.mxu0 0.0
  %586 = vmatpush1.msra.mxu0 %v567
  %587 = vmatprep.subr.mxu0 0.0
  %588 = vmatpush1.msra.mxu0 %v568
  %589 = vmatprep.subr.mxu0 0.0
  %590 = vmatpush1.msra.mxu0 %v569
  %591 = vmatprep.subr.mxu0 0.0
  %592 = vmatpush1.msra.mxu0 %v570
  %593 = vmatprep.subr.mxu0 0.0
  %594 = vmatpush1.msra.mxu0 %v571
  %595 = vmatprep.subr.mxu0 0.0
  %596 = vmatpush1.msra.mxu0 0.0
  %597 = vmatprep.subr.mxu0 0.0
  %598 = vmatpush1.msra.mxu0 0.0
  %599 = vmatprep.subr.mxu0 0.0
  %600 = vmatpush1.msra.mxu0 0.0
  %601 = vmatprep.subr.mxu0 0.0
  %602 = vmatpush1.msra.mxu0 0.0
  %603 = vmatprep.subr.mxu0 0.0
  %604 = vmatpush1.msra.mxu0 0.0
  %605 = vmatprep.subr.mxu0 0.0
  %606 = vmatpush1.msra.mxu0 0.0
  %607 = vmatprep.subr.mxu0 0.0
  %608 = vmatpush1.msra.mxu0 0.0
  %609 = vmatprep.subr.mxu0 0.0
  %610 = vmatpush1.msra.mxu0 0.0
  %611 = vmatprep.subr.mxu0 0.0
  %612 = vmatpush1.msra.mxu0 0.0
  %613 = vmatprep.subr.mxu0 0.0
  %614 = vmatpush1.msra.mxu0 0.0
  %615 = vmatprep.subr.mxu0 0.0
  %616 = vmatpush1.msra.mxu0 0.0
  %617 = vmatprep.subr.mxu0 0.0
  %618 = vmatpush1.msra.mxu0 0.0
  %619 = vmatprep.subr.mxu0 0.0
  %620 = vmatpush1.msra.mxu0 0.0
  %621 = vmatprep.subr.mxu0 0.0
  %622 = vmatpush1.msra.mxu0 0.0
  %623 = vmatprep.subr.mxu0 0.0
  %624 = vmatpush1.msra.mxu0 0.0
  %625 = vmatprep.subr.mxu0 0.0
  %626 = vmatpush1.msra.mxu0 0.0
  %627 = vmatprep.subr.mxu0 0.0
  %628 = vmatpush1.msra.mxu0 0.0
  %629 = vmatprep.subr.mxu0 0.0
  %630 = vmatpush1.msra.mxu0 0.0
  %631 = vmatprep.subr.mxu0 0.0
  %632 = vmatpush1.msra.mxu0 0.0
  %633 = vmatprep.subr.mxu0 0.0
  %634 = vmatpush1.msra.mxu0 0.0
  %635 = vmatprep.subr.mxu0 0.0
  %636 = vmatpush1.msra.mxu0 0.0
  %637 = vmatprep.subr.mxu0 0.0
  %638 = vmatpush1.msra.mxu0 0.0
  %639 = vmatprep.subr.mxu0 0.0
  %640 = vmatpush1.msra.mxu0 0.0
  %641 = vmatprep.subr.mxu0 0.0
  %642 = vmatpush1.msra.mxu0 0.0
  %643 = vmatprep.mubr.f32.mxu0 0.0
  %644 = vmatmul.mubr.f32.gmra.mrb[0].mxu0 %v574
  %v645 = vpop.f32.mrb[0].mxu0
  %v646 = vadd.f32 0.0, %v645
  %v647 = vpop.f32.mrb[0].mxu0
  %648 = vmatprep.mubr.f32.mxu0 0.0
  %649 = vmatmul.mubr.f32.gmra.mrb[0].mxu0 %v577
  %v650 = vpop.f32.mrb[0].mxu0
  %v651 = vadd.f32 0.0, %v650
  %v652 = vpop.f32.mrb[0].mxu0
  %653 = vdwg.mxu0
  %v654 = vadd.f32 %v485, %v646
  %v655 = vadd.f32 %v486, %v651
  %s656 = scalar_lea.vmem %s1, 64
  %v657 = vld [vmem:[%s656] sm:$0xff]
  %v658 = vld [vmem:[%s656 + $0x8] sm:$0xff]
  %v659 = vld [vmem:[%s656 + $0x10] sm:$0xff]
  %v660 = vld [vmem:[%s656 + $0x18] sm:$0xff]
  %v661 = vld [vmem:[%s656 + $0x20] sm:$0xff]
  %v662 = vld [vmem:[%s656 + $0x28] sm:$0xff]
  %v663 = vld [vmem:[%s656 + $0x30] sm:$0xff]
  %v664 = vld [vmem:[%s656 + $0x38] sm:$0xff]
  %v666 = vsel %vm572, %v487, 0
  %v669 = vsel %vm572, %v488, 0
  %671 = vmatprep.subr.mxu0 0.0
  %672 = vmatpush1.msra.mxu0 %v657
  %673 = vmatprep.subr.mxu0 0.0
  %674 = vmatpush1.msra.mxu0 %v658
  %675 = vmatprep.subr.mxu0 0.0
  %676 = vmatpush1.msra.mxu0 %v659
  %677 = vmatprep.subr.mxu0 0.0
  %678 = vmatpush1.msra.mxu0 %v660
  %679 = vmatprep.subr.mxu0 0.0
  %680 = vmatpush1.msra.mxu0 %v661
  %681 = vmatprep.subr.mxu0 0.0
  %682 = vmatpush1.msra.mxu0 %v662
  %683 = vmatprep.subr.mxu0 0.0
  %684 = vmatpush1.msra.mxu0 %v663
  %685 = vmatprep.subr.mxu0 0.0
  %686 = vmatpush1.msra.mxu0 %v664
  %687 = vmatprep.subr.mxu0 0.0
  %688 = vmatpush1.msra.mxu0 0.0
  %689 = vmatprep.subr.mxu0 0.0
  %690 = vmatpush1.msra.mxu0 0.0
  %691 = vmatprep.subr.mxu0 0.0
  %692 = vmatpush1.msra.mxu0 0.0
  %693 = vmatprep.subr.mxu0 0.0
  %694 = vmatpush1.msra.mxu0 0.0
  %695 = vmatprep.subr.mxu0 0.0
  %696 = vmatpush1.msra.mxu0 0.0
  %697 = vmatprep.subr.mxu0 0.0
  %698 = vmatpush1.msra.mxu0 0.0
  %699 = vmatprep.subr.mxu0 0.0
  %700 = vmatpush1.msra.mxu0 0.0
  %701 = vmatprep.subr.mxu0 0.0
  %702 = vmatpush1.msra.mxu0 0.0
  %703 = vmatprep.subr.mxu0 0.0
  %704 = vmatpush1.msra.mxu0 0.0
  %705 = vmatprep.subr.mxu0 0.0
  %706 = vmatpush1.msra.mxu0 0.0
  %707 = vmatprep.subr.mxu0 0.0
  %708 = vmatpush1.msra.mxu0 0.0
  %709 = vmatprep.subr.mxu0 0.0
  %710 = vmatpush1.msra.mxu0 0.0
  %711 = vmatprep.subr.mxu0 0.0
  %712 = vmatpush1.msra.mxu0 0.0
  %713 = vmatprep.subr.mxu0 0.0
  %714 = vmatpush1.msra.mxu0 0.0
  %715 = vmatprep.subr.mxu0 0.0
  %716 = vmatpush1.msra.mxu0 0.0
  %717 = vmatprep.subr.mxu0 0.0
  %718 = vmatpush1.msra.mxu0 0.0
  %719 = vmatprep.subr.mxu0 0.0
  %720 = vmatpush1.msra.mxu0 0.0
  %721 = vmatprep.subr.mxu0 0.0
  %722 = vmatpush1.msra.mxu0 0.0
  %723 = vmatprep.subr.mxu0 0.0
  %724 = vmatpush1.msra.mxu0 0.0
  %725 = vmatprep.subr.mxu0 0.0
  %726 = vmatpush1.msra.mxu0 0.0
  %727 = vmatprep.subr.mxu0 0.0
  %728 = vmatpush1.msra.mxu0 0.0
  %729 = vmatprep.subr.mxu0 0.0
  %730 = vmatpush1.msra.mxu0 0.0
  %731 = vmatprep.subr.mxu0 0.0
  %732 = vmatpush1.msra.mxu0 0.0
  %733 = vmatprep.subr.mxu0 0.0
  %734 = vmatpush1.msra.mxu0 0.0
  %735 = vmatprep.mubr.f32.mxu0 0.0
  %736 = vmatmul.mubr.f32.gmra.mrb[0].mxu0 %v666
  %v737 = vpop.f32.mrb[0].mxu0
  %v738 = vadd.f32 0.0, %v737
  %v739 = vpop.f32.mrb[0].mxu0
  %740 = vmatprep.mubr.f32.mxu0 0.0
  %741 = vmatmul.mubr.f32.gmra.mrb[0].mxu0 %v669
  %v742 = vpop.f32.mrb[0].mxu0
  %v743 = vadd.f32 0.0, %v742
  %v744 = vpop.f32.mrb[0].mxu0
  %745 = vdwg.mxu0
  %v746 = vadd.f32 %v654, %v738
  %v747 = vadd.f32 %v655, %v743
  %748 = vmatprep.subr.mxu0 0.0
  %749 = vmatpush1.msra.mxu0 %v487
  %750 = vmatprep.subr.mxu0 0.0
  %751 = vmatpush1.msra.mxu0 %v488
  %752 = vmatprep.subr.mxu0 0.0
  %753 = vmatpush1.msra.mxu0 0.0
  %754 = vmatprep.subr.mxu0 0.0
  %755 = vmatpush1.msra.mxu0 0.0
  %756 = vmatprep.subr.mxu0 0.0
  %757 = vmatpush1.msra.mxu0 0.0
  %758 = vmatprep.subr.mxu0 0.0
  %759 = vmatpush1.msra.mxu0 0.0
  %760 = vmatprep.subr.mxu0 0.0
  %761 = vmatpush1.msra.mxu0 0.0
  %762 = vmatprep.subr.mxu0 0.0
  %763 = vmatpush1.msra.mxu0 0.0
  %764 = vmatprep.subr.mxu0 0.0
  %765 = vmatpush1.msra.mxu0 0.0
  %766 = vmatprep.subr.mxu0 0.0
  %767 = vmatpush1.msra.mxu0 0.0
  %768 = vmatprep.subr.mxu0 0.0
  %769 = vmatpush1.msra.mxu0 0.0
  %770 = vmatprep.subr.mxu0 0.0
  %771 = vmatpush1.msra.mxu0 0.0
  %772 = vmatprep.subr.mxu0 0.0
  %773 = vmatpush1.msra.mxu0 0.0
  %774 = vmatprep.subr.mxu0 0.0
  %775 = vmatpush1.msra.mxu0 0.0
  %776 = vmatprep.subr.mxu0 0.0
  %777 = vmatpush1.msra.mxu0 0.0
  %778 = vmatprep.subr.mxu0 0.0
  %779 = vmatpush1.msra.mxu0 0.0
  %780 = vmatprep.subr.mxu0 0.0
  %781 = vmatpush1.msra.mxu0 0.0
  %782 = vmatprep.subr.mxu0 0.0
  %783 = vmatpush1.msra.mxu0 0.0
  %784 = vmatprep.subr.mxu0 0.0
  %785 = vmatpush1.msra.mxu0 0.0
  %786 = vmatprep.subr.mxu0 0.0
  %787 = vmatpush1.msra.mxu0 0.0
  %788 = vmatprep.subr.mxu0 0.0
  %789 = vmatpush1.msra.mxu0 0.0
  %790 = vmatprep.subr.mxu0 0.0
  %791 = vmatpush1.msra.mxu0 0.0
  %792 = vmatprep.subr.mxu0 0.0
  %793 = vmatpush1.msra.mxu0 0.0
  %794 = vmatprep.subr.mxu0 0.0
  %795 = vmatpush1.msra.mxu0 0.0
  %796 = vmatprep.subr.mxu0 0.0
  %797 = vmatpush1.msra.mxu0 0.0
  %798 = vmatprep.subr.mxu0 0.0
  %799 = vmatpush1.msra.mxu0 0.0
  %800 = vmatprep.subr.mxu0 0.0
  %801 = vmatpush1.msra.mxu0 0.0
  %802 = vmatprep.subr.mxu0 0.0
  %803 = vmatpush1.msra.mxu0 0.0
  %804 = vmatprep.subr.mxu0 0.0
  %805 = vmatpush1.msra.mxu0 0.0
  %806 = vmatprep.subr.mxu0 0.0
  %807 = vmatpush1.msra.mxu0 0.0
  %808 = vmatprep.subr.mxu0 0.0
  %809 = vmatpush1.msra.mxu0 0.0
  %810 = vmatprep.subr.mxu0 0.0
  %811 = vmatpush1.msra.mxu0 0.0
  %812 = vmatprep.mubr.f32.mxu0 0.0
  %813 = vmatmul.mubr.f32.gmra.mrb[0].mxu0 %v319
  %v814 = vpop.f32.mrb[0].mxu0
  %v815 = vadd.f32 0.0, %v814
  %v816 = vpop.f32.mrb[0].mxu0
  %817 = vmatprep.mubr.f32.mxu0 0.0
  %818 = vmatmul.mubr.f32.gmra.mrb[0].mxu0 %v322
  %v819 = vpop.f32.mrb[0].mxu0
  %v820 = vadd.f32 0.0, %v819
  %v821 = vpop.f32.mrb[0].mxu0
  %822 = vdwg.mxu0
  %s823 = scalar_lea.vmem %s1, 128
  %v824 = vld [vmem:[%s823] sm:$0xff]
  %v825 = vld [vmem:[%s823 + $0x8] sm:$0xff]
  %v826 = vld [vmem:[%s823 + $0x10] sm:$0xff]
  %v827 = vld [vmem:[%s823 + $0x18] sm:$0xff]
  %v828 = vld [vmem:[%s823 + $0x20] sm:$0xff]
  %v829 = vld [vmem:[%s823 + $0x28] sm:$0xff]
  %v830 = vld [vmem:[%s823 + $0x30] sm:$0xff]
  %v831 = vld [vmem:[%s823 + $0x38] sm:$0xff]
  %v833 = vsel %vm572, %v815, 0
  %v836 = vsel %vm572, %v820, 0
  %838 = vmatprep.subr.mxu0 0.0
  %839 = vmatpush1.msra.mxu0 %v824
  %840 = vmatprep.subr.mxu0 0.0
  %841 = vmatpush1.msra.mxu0 %v825
  %842 = vmatprep.subr.mxu0 0.0
  %843 = vmatpush1.msra.mxu0 %v826
  %844 = vmatprep.subr.mxu0 0.0
  %845 = vmatpush1.msra.mxu0 %v827
  %846 = vmatprep.subr.mxu0 0.0
  %847 = vmatpush1.msra.mxu0 %v828
  %848 = vmatprep.subr.mxu0 0.0
  %849 = vmatpush1.msra.mxu0 %v829
  %850 = vmatprep.subr.mxu0 0.0
  %851 = vmatpush1.msra.mxu0 %v830
  %852 = vmatprep.subr.mxu0 0.0
  %853 = vmatpush1.msra.mxu0 %v831
  %854 = vmatprep.subr.mxu0 0.0
  %855 = vmatpush1.msra.mxu0 0.0
  %856 = vmatprep.subr.mxu0 0.0
  %857 = vmatpush1.msra.mxu0 0.0
  %858 = vmatprep.subr.mxu0 0.0
  %859 = vmatpush1.msra.mxu0 0.0
  %860 = vmatprep.subr.mxu0 0.0
  %861 = vmatpush1.msra.mxu0 0.0
  %862 = vmatprep.subr.mxu0 0.0
  %863 = vmatpush1.msra.mxu0 0.0
  %864 = vmatprep.subr.mxu0 0.0
  %865 = vmatpush1.msra.mxu0 0.0
  %866 = vmatprep.subr.mxu0 0.0
  %867 = vmatpush1.msra.mxu0 0.0
  %868 = vmatprep.subr.mxu0 0.0
  %869 = vmatpush1.msra.mxu0 0.0
  %870 = vmatprep.subr.mxu0 0.0
  %871 = vmatpush1.msra.mxu0 0.0
  %872 = vmatprep.subr.mxu0 0.0
  %873 = vmatpush1.msra.mxu0 0.0
  %874 = vmatprep.subr.mxu0 0.0
  %875 = vmatpush1.msra.mxu0 0.0
  %876 = vmatprep.subr.mxu0 0.0
  %877 = vmatpush1.msra.mxu0 0.0
  %878 = vmatprep.subr.mxu0 0.0
  %879 = vmatpush1.msra.mxu0 0.0
  %880 = vmatprep.subr.mxu0 0.0
  %881 = vmatpush1.msra.mxu0 0.0
  %882 = vmatprep.subr.mxu0 0.0
  %883 = vmatpush1.msra.mxu0 0.0
  %884 = vmatprep.subr.mxu0 0.0
  %885 = vmatpush1.msra.mxu0 0.0
  %886 = vmatprep.subr.mxu0 0.0
  %887 = vmatpush1.msra.mxu0 0.0
  %888 = vmatprep.subr.mxu0 0.0
  %889 = vmatpush1.msra.mxu0 0.0
  %890 = vmatprep.subr.mxu0 0.0
  %891 = vmatpush1.msra.mxu0 0.0
  %892 = vmatprep.subr.mxu0 0.0
  %893 = vmatpush1.msra.mxu0 0.0
  %894 = vmatprep.subr.mxu0 0.0
  %895 = vmatpush1.msra.mxu0 0.0
  %896 = vmatprep.subr.mxu0 0.0
  %897 = vmatpush1.msra.mxu0 0.0
  %898 = vmatprep.subr.mxu0 0.0
  %899 = vmatpush1.msra.mxu0 0.0
  %900 = vmatprep.subr.mxu0 0.0
  %901 = vmatpush1.msra.mxu0 0.0
  %902 = vmatprep.mubr.f32.mxu0 0.0
  %903 = vmatmul.mubr.f32.gmra.mrb[0].mxu0 %v833
  %v904 = vpop.f32.mrb[0].mxu0
  %v905 = vadd.f32 0.0, %v904
  %v906 = vpop.f32.mrb[0].mxu0
  %907 = vmatprep.mubr.f32.mxu0 0.0
  %908 = vmatmul.mubr.f32.gmra.mrb[0].mxu0 %v836
  %v909 = vpop.f32.mrb[0].mxu0
  %v910 = vadd.f32 0.0, %v909
  %v911 = vpop.f32.mrb[0].mxu0
  %912 = vdwg.mxu0
  %v913 = vadd.f32 %v746, %v905
  %v914 = vadd.f32 %v747, %v910
  %915 = vst [vmem:[%s4] sm:$0xff] %v913
  %916 = vst [vmem:[%s4 + $0x8] sm:$0xff] %v914
  %s917 = scalar_lea.vmem %s0, 16
  %v918 = vld [vmem:[%s917] sm:$0xff]
  %v919 = vld [vmem:[%s917 + $0x8] sm:$0xff]
  %920 = vmatprep.subr.mxu0 0.0
  %921 = vmatpush1.msra.mxu0 %v918
  %922 = vmatprep.subr.mxu0 0.0
  %923 = vmatpush1.msra.mxu0 %v919
  %924 = vmatprep.subr.mxu0 0.0
  %925 = vmatpush1.msra.mxu0 0.0
  %926 = vmatprep.subr.mxu0 0.0
  %927 = vmatpush1.msra.mxu0 0.0
  %928 = vmatprep.subr.mxu0 0.0
  %929 = vmatpush1.msra.mxu0 0.0
  %930 = vmatprep.subr.mxu0 0.0
  %931 = vmatpush1.msra.mxu0 0.0
  %932 = vmatprep.subr.mxu0 0.0
  %933 = vmatpush1.msra.mxu0 0.0
  %934 = vmatprep.subr.mxu0 0.0
  %935 = vmatpush1.msra.mxu0 0.0
  %936 = vmatprep.subr.mxu0 0.0
  %937 = vmatpush1.msra.mxu0 0.0
  %938 = vmatprep.subr.mxu0 0.0
  %939 = vmatpush1.msra.mxu0 0.0
  %940 = vmatprep.subr.mxu0 0.0
  %941 = vmatpush1.msra.mxu0 0.0
  %942 = vmatprep.subr.mxu0 0.0
  %943 = vmatpush1.msra.mxu0 0.0
  %944 = vmatprep.subr.mxu0 0.0
  %945 = vmatpush1.msra.mxu0 0.0
  %946 = vmatprep.subr.mxu0 0.0
  %947 = vmatpush1.msra.mxu0 0.0
  %948 = vmatprep.subr.mxu0 0.0
  %949 = vmatpush1.msra.mxu0 0.0
  %950 = vmatprep.subr.mxu0 0.0
  %951 = vmatpush1.msra.mxu0 0.0
  %952 = vmatprep.subr.mxu0 0.0
  %953 = vmatpush1.msra.mxu0 0.0
  %954 = vmatprep.subr.mxu0 0.0
  %955 = vmatpush1.msra.mxu0 0.0
  %956 = vmatprep.subr.mxu0 0.0
  %957 = vmatpush1.msra.mxu0 0.0
  %958 = vmatprep.subr.mxu0 0.0
  %959 = vmatpush1.msra.mxu0 0.0
  %960 = vmatprep.subr.mxu0 0.0
  %961 = vmatpush1.msra.mxu0 0.0
  %962 = vmatprep.subr.mxu0 0.0
  %963 = vmatpush1.msra.mxu0 0.0
  %964 = vmatprep.subr.mxu0 0.0
  %965 = vmatpush1.msra.mxu0 0.0
  %966 = vmatprep.subr.mxu0 0.0
  %967 = vmatpush1.msra.mxu0 0.0
  %968 = vmatprep.subr.mxu0 0.0
  %969 = vmatpush1.msra.mxu0 0.0
  %970 = vmatprep.subr.mxu0 0.0
  %971 = vmatpush1.msra.mxu0 0.0
  %972 = vmatprep.subr.mxu0 0.0
  %973 = vmatpush1.msra.mxu0 0.0
  %974 = vmatprep.subr.mxu0 0.0
  %975 = vmatpush1.msra.mxu0 0.0
  %976 = vmatprep.subr.mxu0 0.0
  %977 = vmatpush1.msra.mxu0 0.0
  %978 = vmatprep.subr.mxu0 0.0
  %979 = vmatpush1.msra.mxu0 0.0
  %980 = vmatprep.subr.mxu0 0.0
  %981 = vmatpush1.msra.mxu0 0.0
  %982 = vmatprep.subr.mxu0 0.0
  %983 = vmatpush1.msra.mxu0 0.0
  %984 = vmatprep.mubr.f32.mxu0 0.0
  %985 = vmatmul.mubr.f32.gmra.mrb[0].mxu0 %v62
  %v986 = vpop.f32.mrb[0].mxu0
  %v987 = vadd.f32 0.0, %v986
  %v988 = vpop.f32.mrb[0].mxu0
  %989 = vmatprep.mubr.f32.mxu0 0.0
  %990 = vmatmul.mubr.f32.gmra.mrb[0].mxu0 %v65
  %v991 = vpop.f32.mrb[0].mxu0
  %v992 = vadd.f32 0.0, %v991
  %v993 = vpop.f32.mrb[0].mxu0
  %994 = vdwg.mxu0
  %v995 = vld [vmem:[%s1] sm:$0xff]
  %v996 = vld [vmem:[%s1 + $0x8] sm:$0xff]
  %v997 = vld [vmem:[%s1 + $0x10] sm:$0xff]
  %v998 = vld [vmem:[%s1 + $0x18] sm:$0xff]
  %v999 = vld [vmem:[%s1 + $0x20] sm:$0xff]
  %v1000 = vld [vmem:[%s1 + $0x28] sm:$0xff]
  %v1001 = vld [vmem:[%s1 + $0x30] sm:$0xff]
  %v1002 = vld [vmem:[%s1 + $0x38] sm:$0xff]
  %v1004 = vsel %vm572, %v987, 0
  %v1007 = vsel %vm572, %v992, 0
  %1009 = vmatprep.subr.mxu0 0.0
  %1010 = vmatpush1.msra.mxu0 %v995
  %1011 = vmatprep.subr.mxu0 0.0
  %1012 = vmatpush1.msra.mxu0 %v996
  %1013 = vmatprep.subr.mxu0 0.0
  %1014 = vmatpush1.msra.mxu0 %v997
  %1015 = vmatprep.subr.mxu0 0.0
  %1016 = vmatpush1.msra.mxu0 %v998
  %1017 = vmatprep.subr.mxu0 0.0
  %1018 = vmatpush1.msra.mxu0 %v999
  %1019 = vmatprep.subr.mxu0 0.0
  %1020 = vmatpush1.msra.mxu0 %v1000
  %1021 = vmatprep.subr.mxu0 0.0
  %1022 = vmatpush1.msra.mxu0 %v1001
  %1023 = vmatprep.subr.mxu0 0.0
  %1024 = vmatpush1.msra.mxu0 %v1002
  %1025 = vmatprep.subr.mxu0 0.0
  %1026 = vmatpush1.msra.mxu0 0.0
  %1027 = vmatprep.subr.mxu0 0.0
  %1028 = vmatpush1.msra.mxu0 0.0
  %1029 = vmatprep.subr.mxu0 0.0
  %1030 = vmatpush1.msra.mxu0 0.0
  %1031 = vmatprep.subr.mxu0 0.0
  %1032 = vmatpush1.msra.mxu0 0.0
  %1033 = vmatprep.subr.mxu0 0.0
  %1034 = vmatpush1.msra.mxu0 0.0
  %1035 = vmatprep.subr.mxu0 0.0
  %1036 = vmatpush1.msra.mxu0 0.0
  %1037 = vmatprep.subr.mxu0 0.0
  %1038 = vmatpush1.msra.mxu0 0.0
  %1039 = vmatprep.subr.mxu0 0.0
  %1040 = vmatpush1.msra.mxu0 0.0
  %1041 = vmatprep.subr.mxu0 0.0
  %1042 = vmatpush1.msra.mxu0 0.0
  %1043 = vmatprep.subr.mxu0 0.0
  %1044 = vmatpush1.msra.mxu0 0.0
  %1045 = vmatprep.subr.mxu0 0.0
  %1046 = vmatpush1.msra.mxu0 0.0
  %1047 = vmatprep.subr.mxu0 0.0
  %1048 = vmatpush1.msra.mxu0 0.0
  %1049 = vmatprep.subr.mxu0 0.0
  %1050 = vmatpush1.msra.mxu0 0.0
  %1051 = vmatprep.subr.mxu0 0.0
  %1052 = vmatpush1.msra.mxu0 0.0
  %1053 = vmatprep.subr.mxu0 0.0
  %1054 = vmatpush1.msra.mxu0 0.0
  %1055 = vmatprep.subr.mxu0 0.0
  %1056 = vmatpush1.msra.mxu0 0.0
  %1057 = vmatprep.subr.mxu0 0.0
  %1058 = vmatpush1.msra.mxu0 0.0
  %1059 = vmatprep.subr.mxu0 0.0
  %1060 = vmatpush1.msra.mxu0 0.0
  %1061 = vmatprep.subr.mxu0 0.0
  %1062 = vmatpush1.msra.mxu0 0.0
  %1063 = vmatprep.subr.mxu0 0.0
  %1064 = vmatpush1.msra.mxu0 0.0
  %1065 = vmatprep.subr.mxu0 0.0
  %1066 = vmatpush1.msra.mxu0 0.0
  %1067 = vmatprep.subr.mxu0 0.0
  %1068 = vmatpush1.msra.mxu0 0.0
  %1069 = vmatprep.subr.mxu0 0.0
  %1070 = vmatpush1.msra.mxu0 0.0
  %1071 = vmatprep.subr.mxu0 0.0
  %1072 = vmatpush1.msra.mxu0 0.0
  %1073 = vmatprep.mubr.f32.mxu0 0.0
  %1074 = vmatmul.mubr.f32.gmra.mrb[0].mxu0 %v1004
  %v1075 = vpop.f32.mrb[0].mxu0
  %v1076 = vadd.f32 0.0, %v1075
  %v1077 = vpop.f32.mrb[0].mxu0
  %1078 = vmatprep.mubr.f32.mxu0 0.0
  %1079 = vmatmul.mubr.f32.gmra.mrb[0].mxu0 %v1007
  %v1080 = vpop.f32.mrb[0].mxu0
  %v1081 = vadd.f32 0.0, %v1080
  %v1082 = vpop.f32.mrb[0].mxu0
  %1083 = vdwg.mxu0
  %v1084 = vadd.f32 %v485, %v1076
  %v1085 = vadd.f32 %v486, %v1081
  %v1086 = vld [vmem:[%s656] sm:$0xff]
  %v1087 = vld [vmem:[%s656 + $0x8] sm:$0xff]
  %v1088 = vld [vmem:[%s656 + $0x10] sm:$0xff]
  %v1089 = vld [vmem:[%s656 + $0x18] sm:$0xff]
  %v1090 = vld [vmem:[%s656 + $0x20] sm:$0xff]
  %v1091 = vld [vmem:[%s656 + $0x28] sm:$0xff]
  %v1092 = vld [vmem:[%s656 + $0x30] sm:$0xff]
  %v1093 = vld [vmem:[%s656 + $0x38] sm:$0xff]
  %v1095 = vsel %vm572, %v918, 0
  %v1098 = vsel %vm572, %v919, 0
  %1100 = vmatprep.subr.mxu0 0.0
  %1101 = vmatpush1.msra.mxu0 %v1086
  %1102 = vmatprep.subr.mxu0 0.0
  %1103 = vmatpush1.msra.mxu0 %v1087
  %1104 = vmatprep.subr.mxu0 0.0
  %1105 = vmatpush1.msra.mxu0 %v1088
  %1106 = vmatprep.subr.mxu0 0.0
  %1107 = vmatpush1.msra.mxu0 %v1089
  %1108 = vmatprep.subr.mxu0 0.0
  %1109 = vmatpush1.msra.mxu0 %v1090
  %1110 = vmatprep.subr.mxu0 0.0
  %1111 = vmatpush1.msra.mxu0 %v1091
  %1112 = vmatprep.subr.mxu0 0.0
  %1113 = vmatpush1.msra.mxu0 %v1092
  %1114 = vmatprep.subr.mxu0 0.0
  %1115 = vmatpush1.msra.mxu0 %v1093
  %1116 = vmatprep.subr.mxu0 0.0
  %1117 = vmatpush1.msra.mxu0 0.0
  %1118 = vmatprep.subr.mxu0 0.0
  %1119 = vmatpush1.msra.mxu0 0.0
  %1120 = vmatprep.subr.mxu0 0.0
  %1121 = vmatpush1.msra.mxu0 0.0
  %1122 = vmatprep.subr.mxu0 0.0
  %1123 = vmatpush1.msra.mxu0 0.0
  %1124 = vmatprep.subr.mxu0 0.0
  %1125 = vmatpush1.msra.mxu0 0.0
  %1126 = vmatprep.subr.mxu0 0.0
  %1127 = vmatpush1.msra.mxu0 0.0
  %1128 = vmatprep.subr.mxu0 0.0
  %1129 = vmatpush1.msra.mxu0 0.0
  %1130 = vmatprep.subr.mxu0 0.0
  %1131 = vmatpush1.msra.mxu0 0.0
  %1132 = vmatprep.subr.mxu0 0.0
  %1133 = vmatpush1.msra.mxu0 0.0
  %1134 = vmatprep.subr.mxu0 0.0
  %1135 = vmatpush1.msra.mxu0 0.0
  %1136 = vmatprep.subr.mxu0 0.0
  %1137 = vmatpush1.msra.mxu0 0.0
  %1138 = vmatprep.subr.mxu0 0.0
  %1139 = vmatpush1.msra.mxu0 0.0
  %1140 = vmatprep.subr.mxu0 0.0
  %1141 = vmatpush1.msra.mxu0 0.0
  %1142 = vmatprep.subr.mxu0 0.0
  %1143 = vmatpush1.msra.mxu0 0.0
  %1144 = vmatprep.subr.mxu0 0.0
  %1145 = vmatpush1.msra.mxu0 0.0
  %1146 = vmatprep.subr.mxu0 0.0
  %1147 = vmatpush1.msra.mxu0 0.0
  %1148 = vmatprep.subr.mxu0 0.0
  %1149 = vmatpush1.msra.mxu0 0.0
  %1150 = vmatprep.subr.mxu0 0.0
  %1151 = vmatpush1.msra.mxu0 0.0
  %1152 = vmatprep.subr.mxu0 0.0
  %1153 = vmatpush1.msra.mxu0 0.0
  %1154 = vmatprep.subr.mxu0 0.0
  %1155 = vmatpush1.msra.mxu0 0.0
  %1156 = vmatprep.subr.mxu0 0.0
  %1157 = vmatpush1.msra.mxu0 0.0
  %1158 = vmatprep.subr.mxu0 0.0
  %1159 = vmatpush1.msra.mxu0 0.0
  %1160 = vmatprep.subr.mxu0 0.0
  %1161 = vmatpush1.msra.mxu0 0.0
  %1162 = vmatprep.subr.mxu0 0.0
  %1163 = vmatpush1.msra.mxu0 0.0
  %1164 = vmatprep.mubr.f32.mxu0 0.0
  %1165 = vmatmul.mubr.f32.gmra.mrb[0].mxu0 %v1095
  %v1166 = vpop.f32.mrb[0].mxu0
  %v1167 = vadd.f32 0.0, %v1166
  %v1168 = vpop.f32.mrb[0].mxu0
  %1169 = vmatprep.mubr.f32.mxu0 0.0
  %1170 = vmatmul.mubr.f32.gmra.mrb[0].mxu0 %v1098
  %v1171 = vpop.f32.mrb[0].mxu0
  %v1172 = vadd.f32 0.0, %v1171
  %v1173 = vpop.f32.mrb[0].mxu0
  %1174 = vdwg.mxu0
  %v1175 = vadd.f32 %v1084, %v1167
  %v1176 = vadd.f32 %v1085, %v1172
  %1177 = vmatprep.subr.mxu0 0.0
  %1178 = vmatpush1.msra.mxu0 %v918
  %1179 = vmatprep.subr.mxu0 0.0
  %1180 = vmatpush1.msra.mxu0 %v919
  %1181 = vmatprep.subr.mxu0 0.0
  %1182 = vmatpush1.msra.mxu0 0.0
  %1183 = vmatprep.subr.mxu0 0.0
  %1184 = vmatpush1.msra.mxu0 0.0
  %1185 = vmatprep.subr.mxu0 0.0
  %1186 = vmatpush1.msra.mxu0 0.0
  %1187 = vmatprep.subr.mxu0 0.0
  %1188 = vmatpush1.msra.mxu0 0.0
  %1189 = vmatprep.subr.mxu0 0.0
  %1190 = vmatpush1.msra.mxu0 0.0
  %1191 = vmatprep.subr.mxu0 0.0
  %1192 = vmatpush1.msra.mxu0 0.0
  %1193 = vmatprep.subr.mxu0 0.0
  %1194 = vmatpush1.msra.mxu0 0.0
  %1195 = vmatprep.subr.mxu0 0.0
  %1196 = vmatpush1.msra.mxu0 0.0
  %1197 = vmatprep.subr.mxu0 0.0
  %1198 = vmatpush1.msra.mxu0 0.0
  %1199 = vmatprep.subr.mxu0 0.0
  %1200 = vmatpush1.msra.mxu0 0.0
  %1201 = vmatprep.subr.mxu0 0.0
  %1202 = vmatpush1.msra.mxu0 0.0
  %1203 = vmatprep.subr.mxu0 0.0
  %1204 = vmatpush1.msra.mxu0 0.0
  %1205 = vmatprep.subr.mxu0 0.0
  %1206 = vmatpush1.msra.mxu0 0.0
  %1207 = vmatprep.subr.mxu0 0.0
  %1208 = vmatpush1.msra.mxu0 0.0
  %1209 = vmatprep.subr.mxu0 0.0
  %1210 = vmatpush1.msra.mxu0 0.0
  %1211 = vmatprep.subr.mxu0 0.0
  %1212 = vmatpush1.msra.mxu0 0.0
  %1213 = vmatprep.subr.mxu0 0.0
  %1214 = vmatpush1.msra.mxu0 0.0
  %1215 = vmatprep.subr.mxu0 0.0
  %1216 = vmatpush1.msra.mxu0 0.0
  %1217 = vmatprep.subr.mxu0 0.0
  %1218 = vmatpush1.msra.mxu0 0.0
  %1219 = vmatprep.subr.mxu0 0.0
  %1220 = vmatpush1.msra.mxu0 0.0
  %1221 = vmatprep.subr.mxu0 0.0
  %1222 = vmatpush1.msra.mxu0 0.0
  %1223 = vmatprep.subr.mxu0 0.0
  %1224 = vmatpush1.msra.mxu0 0.0
  %1225 = vmatprep.subr.mxu0 0.0
  %1226 = vmatpush1.msra.mxu0 0.0
  %1227 = vmatprep.subr.mxu0 0.0
  %1228 = vmatpush1.msra.mxu0 0.0
  %1229 = vmatprep.subr.mxu0 0.0
  %1230 = vmatpush1.msra.mxu0 0.0
  %1231 = vmatprep.subr.mxu0 0.0
  %1232 = vmatpush1.msra.mxu0 0.0
  %1233 = vmatprep.subr.mxu0 0.0
  %1234 = vmatpush1.msra.mxu0 0.0
  %1235 = vmatprep.subr.mxu0 0.0
  %1236 = vmatpush1.msra.mxu0 0.0
  %1237 = vmatprep.subr.mxu0 0.0
  %1238 = vmatpush1.msra.mxu0 0.0
  %1239 = vmatprep.subr.mxu0 0.0
  %1240 = vmatpush1.msra.mxu0 0.0
  %1241 = vmatprep.mubr.f32.mxu0 0.0
  %1242 = vmatmul.mubr.f32.gmra.mrb[0].mxu0 %v319
  %v1243 = vpop.f32.mrb[0].mxu0
  %v1244 = vadd.f32 0.0, %v1243
  %v1245 = vpop.f32.mrb[0].mxu0
  %1246 = vmatprep.mubr.f32.mxu0 0.0
  %1247 = vmatmul.mubr.f32.gmra.mrb[0].mxu0 %v322
  %v1248 = vpop.f32.mrb[0].mxu0
  %v1249 = vadd.f32 0.0, %v1248
  %v1250 = vpop.f32.mrb[0].mxu0
  %1251 = vdwg.mxu0
  %v1252 = vld [vmem:[%s823] sm:$0xff]
  %v1253 = vld [vmem:[%s823 + $0x8] sm:$0xff]
  %v1254 = vld [vmem:[%s823 + $0x10] sm:$0xff]
  %v1255 = vld [vmem:[%s823 + $0x18] sm:$0xff]
  %v1256 = vld [vmem:[%s823 + $0x20] sm:$0xff]
  %v1257 = vld [vmem:[%s823 + $0x28] sm:$0xff]
  %v1258 = vld [vmem:[%s823 + $0x30] sm:$0xff]
  %v1259 = vld [vmem:[%s823 + $0x38] sm:$0xff]
  %v1261 = vsel %vm572, %v1244, 0
  %v1264 = vsel %vm572, %v1249, 0
  %1266 = vmatprep.subr.mxu0 0.0
  %1267 = vmatpush1.msra.mxu0 %v1252
  %1268 = vmatprep.subr.mxu0 0.0
  %1269 = vmatpush1.msra.mxu0 %v1253
  %1270 = vmatprep.subr.mxu0 0.0
  %1271 = vmatpush1.msra.mxu0 %v1254
  %1272 = vmatprep.subr.mxu0 0.0
  %1273 = vmatpush1.msra.mxu0 %v1255
  %1274 = vmatprep.subr.mxu0 0.0
  %1275 = vmatpush1.msra.mxu0 %v1256
  %1276 = vmatprep.subr.mxu0 0.0
  %1277 = vmatpush1.msra.mxu0 %v1257
  %1278 = vmatprep.subr.mxu0 0.0
  %1279 = vmatpush1.msra.mxu0 %v1258
  %1280 = vmatprep.subr.mxu0 0.0
  %1281 = vmatpush1.msra.mxu0 %v1259
  %1282 = vmatprep.subr.mxu0 0.0
  %1283 = vmatpush1.msra.mxu0 0.0
  %1284 = vmatprep.subr.mxu0 0.0
  %1285 = vmatpush1.msra.mxu0 0.0
  %1286 = vmatprep.subr.mxu0 0.0
  %1287 = vmatpush1.msra.mxu0 0.0
  %1288 = vmatprep.subr.mxu0 0.0
  %1289 = vmatpush1.msra.mxu0 0.0
  %1290 = vmatprep.subr.mxu0 0.0
  %1291 = vmatpush1.msra.mxu0 0.0
  %1292 = vmatprep.subr.mxu0 0.0
  %1293 = vmatpush1.msra.mxu0 0.0
  %1294 = vmatprep.subr.mxu0 0.0
  %1295 = vmatpush1.msra.mxu0 0.0
  %1296 = vmatprep.subr.mxu0 0.0
  %1297 = vmatpush1.msra.mxu0 0.0
  %1298 = vmatprep.subr.mxu0 0.0
  %1299 = vmatpush1.msra.mxu0 0.0
  %1300 = vmatprep.subr.mxu0 0.0
  %1301 = vmatpush1.msra.mxu0 0.0
  %1302 = vmatprep.subr.mxu0 0.0
  %1303 = vmatpush1.msra.mxu0 0.0
  %1304 = vmatprep.subr.mxu0 0.0
  %1305 = vmatpush1.msra.mxu0 0.0
  %1306 = vmatprep.subr.mxu0 0.0
  %1307 = vmatpush1.msra.mxu0 0.0
  %1308 = vmatprep.subr.mxu0 0.0
  %1309 = vmatpush1.msra.mxu0 0.0
  %1310 = vmatprep.subr.mxu0 0.0
  %1311 = vmatpush1.msra.mxu0 0.0
  %1312 = vmatprep.subr.mxu0 0.0
  %1313 = vmatpush1.msra.mxu0 0.0
  %1314 = vmatprep.subr.mxu0 0.0
  %1315 = vmatpush1.msra.mxu0 0.0
  %1316 = vmatprep.subr.mxu0 0.0
  %1317 = vmatpush1.msra.mxu0 0.0
  %1318 = vmatprep.subr.mxu0 0.0
  %1319 = vmatpush1.msra.mxu0 0.0
  %1320 = vmatprep.subr.mxu0 0.0
  %1321 = vmatpush1.msra.mxu0 0.0
  %1322 = vmatprep.subr.mxu0 0.0
  %1323 = vmatpush1.msra.mxu0 0.0
  %1324 = vmatprep.subr.mxu0 0.0
  %1325 = vmatpush1.msra.mxu0 0.0
  %1326 = vmatprep.subr.mxu0 0.0
  %1327 = vmatpush1.msra.mxu0 0.0
  %1328 = vmatprep.subr.mxu0 0.0
  %1329 = vmatpush1.msra.mxu0 0.0
  %1330 = vmatprep.mubr.f32.mxu0 0.0
  %1331 = vmatmul.mubr.f32.gmra.mrb[0].mxu0 %v1261
  %v1332 = vpop.f32.mrb[0].mxu0
  %v1333 = vadd.f32 0.0, %v1332
  %v1334 = vpop.f32.mrb[0].mxu0
  %1335 = vmatprep.mubr.f32.mxu0 0.0
  %1336 = vmatmul.mubr.f32.gmra.mrb[0].mxu0 %v1264
  %v1337 = vpop.f32.mrb[0].mxu0
  %v1338 = vadd.f32 0.0, %v1337
  %v1339 = vpop.f32.mrb[0].mxu0
  %1340 = vdwg.mxu0
  %v1341 = vadd.f32 %v1175, %v1333
  %v1342 = vadd.f32 %v1176, %v1338
  %s1343 = scalar_lea.vmem %s4, 16
  %1344 = vst [vmem:[%s1343] sm:$0xff] %v1341
  %1345 = vst [vmem:[%s1343 + $0x8] sm:$0xff] %v1342
  // Predicated region
  $region18: #{coord_conv_forward.1} parent=0 // pred_check
    _
  $region19: #{coord_conv_forward.1} parent=0 // pred_check_branch
    %1347 = sbr.rel (0) target = $region21
  $region20: #{coord_conv_forward.1} parent=0 // pred_region
    _
  $region21: #{coord_conv_forward.1} parent=0 // pred_fallthru
    _
  // Predicated region
  $region22: #{coord_conv_forward.1} parent=0 // pred_check
    _
  $region23: #{coord_conv_forward.1} parent=0 // pred_check_branch
    %1349 = sbr.rel (0) target = $region25
  $region24: #{coord_conv_forward.1} parent=0 // pred_region
    _
  $region25: #{coord_conv_forward.1} parent=0 // pred_fallthru
    _

</llo_original>
